<compile_context>
chip_gen: v6e
topology: v6e:2x2x1
jax: 0.10.0
libtpu: 0.0.40
codegen_flags: <defaults>
</compile_context>

<pallas_src>
import functools

import jax
import jax.numpy as jnp
from jax.experimental import pallas as pl
from jax.experimental.pallas import tpu as pltpu


# ----------------------------------------------------------------------------
# Kernel
# ----------------------------------------------------------------------------
def _actor_kernel(x_ref,
                  w1_ref, w2_ref, w3_ref, wm_ref,
                  b_ref,                      # packed biases [4, max_dim] f32
                  o_ref,
                  *, fc1_dims: int, fc2_dims: int, fc3_dims: int,
                  n_actions: int, max_action: float):
    # Compute dtype follows the stored weight dtype (bf16 default, f32 fallback).
    cdt = w1_ref.dtype

    # fc1 + ReLU  (MXU inputs in weight dtype, f32 accumulate; bias/ReLU in f32)
    x = x_ref[...].astype(cdt)
    h = jnp.dot(x, w1_ref[...], preferred_element_type=jnp.float32)
    h = h + b_ref[pl.ds(0, 1), pl.ds(0, fc1_dims)]
    h = jnp.maximum(h, 0.0).astype(cdt)

    # fc2 + ReLU
    h = jnp.dot(h, w2_ref[...], preferred_element_type=jnp.float32)
    h = h + b_ref[pl.ds(1, 1), pl.ds(0, fc2_dims)]
    h = jnp.maximum(h, 0.0).astype(cdt)

    # fc3 + ReLU
    h = jnp.dot(h, w3_ref[...], preferred_element_type=jnp.float32)
    h = h + b_ref[pl.ds(2, 1), pl.ds(0, fc3_dims)]
    h = jnp.maximum(h, 0.0).astype(cdt)

    # mu head: tanh(.) * max_action, in f32
    mu = jnp.dot(h, wm_ref[...], preferred_element_type=jnp.float32)
    mu = mu + b_ref[pl.ds(3, 1), pl.ds(0, n_actions)]
    o_ref[...] = (jnp.tanh(mu) * jnp.float32(max_action)).astype(o_ref.dtype)


# ----------------------------------------------------------------------------
# Wrapper
# ----------------------------------------------------------------------------
def _round_up(x: int, m: int) -> int:
    return ((x + m - 1) // m) * m


def _cdiv(a: int, b: int) -> int:
    return -(-a // b)


def _pick_batch_tile(B: int, max_batch_tile: int, multi_core_batch: int = 64) -> int:
    """Balanced batch tile: multiple of 8 sublanes, <= max_batch_tile, and
    >= 2 tiles whenever B >= multi_core_batch (so v7x's second TC gets work)."""
    if B <= 8:
        return 8
    n_tiles = _cdiv(B, max_batch_tile)
    if B >= multi_core_batch:
        n_tiles = max(n_tiles, 2)
    tb = _round_up(_cdiv(B, n_tiles), 8)
    return min(tb, _round_up(max_batch_tile, 8))


def actor_forward(state, params, *, max_action=1.0, max_batch_tile=1024):
    """state: [B, state_dims] (f32 or bf16).  params: dict with
    'w1','w2','w3','wm' ([in, out], bf16 or f32) and 'bias' ([4, max_dim] f32)."""
    w1, w2, w3, wm, bias = (params["w1"], params["w2"], params["w3"],
                            params["wm"], params["bias"])
    B, state_dims = state.shape
    fc1_dims, fc2_dims, fc3_dims = w1.shape[1], w2.shape[1], w3.shape[1]
    n_actions = wm.shape[1]

    tb = _pick_batch_tile(B, max_batch_tile)
    b_pad = _round_up(B, tb)
    if b_pad != B:
        state = jnp.pad(state, ((0, b_pad - B), (0, 0)))
    grid_b = b_pad // tb

    # Weights / packed biases: full-extent blocks with constant index_maps ->
    # fetched once, VMEM-resident across all batch tiles.
    resident = lambda a: pl.BlockSpec(a.shape, lambda i: (0,) * a.ndim)

    kernel = functools.partial(
        _actor_kernel,
        fc1_dims=fc1_dims, fc2_dims=fc2_dims, fc3_dims=fc3_dims,
        n_actions=n_actions, max_action=float(max_action))

    out = pl.pallas_call(
        kernel,
        out_shape=jax.ShapeDtypeStruct((b_pad, n_actions), jnp.float32),
        grid=(grid_b,),
        in_specs=[
            pl.BlockSpec((tb, state_dims), lambda i: (i, 0)),
            resident(w1), resident(w2), resident(w3), resident(wm),
            resident(bias),
        ],
        out_specs=pl.BlockSpec((tb, n_actions), lambda i: (i, 0)),
        compiler_params=pltpu.CompilerParams(
            dimension_semantics=("parallel",)),
    )(state, w1, w2, w3, wm, bias)

    return out[:B]


# ----------------------------------------------------------------------------
# Params (nn.Linear-style init, uniform +/- 1/sqrt(fan_in)) and packing
# ----------------------------------------------------------------------------
def init_params_f32(key, state_dims, n_actions, fc1=256, fc2=256, fc3=256):
    def linear(key, fan_in, fan_out):
        kw, kb = jax.random.split(key)
        bound = 1.0 / jnp.sqrt(jnp.float32(fan_in))
        w = jax.random.uniform(kw, (fan_in, fan_out), jnp.float32, -bound, bound)
        b = jax.random.uniform(kb, (fan_out,), jnp.float32, -bound, bound)
        return w, b

    k1, k2, k3, k4 = jax.random.split(key, 4)
    return {
        "fc1": linear(k1, state_dims, fc1),
        "fc2": linear(k2, fc1, fc2),
        "fc3": linear(k3, fc2, fc3),
        "mu":  linear(k4, fc3, n_actions),
    }


def pack_params(params_f32, weight_dtype=jnp.bfloat16):
    """Kernel params: weights [in, out] in weight_dtype (transposed vs PyTorch's
    [out, in]), and all four biases packed into one [4, max_dim] f32 array."""
    w1, b1 = params_f32["fc1"]
    w2, b2 = params_f32["fc2"]
    w3, b3 = params_f32["fc3"]
    wm, bm = params_f32["mu"]
    max_dim = max(_round_up(max(w1.shape[1], w2.shape[1], w3.shape[1], wm.shape[1]), 128), 128)

    def pad_row(b):
        return jnp.pad(b, (0, max_dim - b.shape[0]))

    bias = jnp.stack([pad_row(b1), pad_row(b2), pad_row(b3), pad_row(bm)],
                     axis=0).astype(jnp.float32)
    return {
        "w1": w1.astype(weight_dtype), "w2": w2.astype(weight_dtype),
        "w3": w3.astype(weight_dtype), "wm": wm.astype(weight_dtype),
        "bias": bias,
    }


# ----------------------------------------------------------------------------
# Pure-JAX references
# ----------------------------------------------------------------------------
def actor_forward_ref(state, params_f32, *, max_action=1.0, dot_dtype=None):
    """dot_dtype=None: full f32 reference.  dot_dtype=bf16: mimics the kernel's
    bf16-input / f32-accumulate matmuls."""
    h = state
    for name in ("fc1", "fc2", "fc3"):
        w, b = params_f32[name]
        if dot_dtype is not None:
            h = jnp.dot(h.astype(dot_dtype), w.astype(dot_dtype),
                        preferred_element_type=jnp.float32) + b
        else:
            h = h @ w + b
        h = jnp.maximum(h, 0.0)
    wm, bm = params_f32["mu"]
    if dot_dtype is not None:
        mu = jnp.dot(h.astype(dot_dtype), wm.astype(dot_dtype),
                     preferred_element_type=jnp.float32) + bm
    else:
        mu = h @ wm + bm
    return jnp.tanh(mu) * max_action


# ----------------------------------------------------------------------------
# Self-test
# ----------------------------------------------------------------------------
if __name__ == "__main__":
    key = jax.random.PRNGKey(0)
    k_params, k_state = jax.random.split(key)

    state_dims = 16
    n_actions = 8
    max_action = 1.0

    params_f32 = init_params_f32(k_params, state_dims, n_actions)
    params_bf16 = pack_params(params_f32, jnp.bfloat16)
    params_full = pack_params(params_f32, jnp.float32)

    # Case 1: B=300 -> balanced 2 x 152-row tiles (padding + 2-step pipelined
    # grid; both TensorCores on v7x).
    batch = 300
    state = jax.random.normal(k_state, (batch, state_dims), jnp.float32)
    out = jax.block_until_ready(
        actor_forward(state, params_bf16, max_action=max_action))
    assert out.shape == (batch, n_actions)

    ref_bf16 = actor_forward_ref(state, params_f32, max_action=max_action,
                                 dot_dtype=jnp.bfloat16)
    ref_f32 = actor_forward_ref(state, params_f32, max_action=max_action)
    assert jnp.allclose(out, ref_bf16, atol=2e-3, rtol=2e-3), \
        float(jnp.max(jnp.abs(out - ref_bf16)))
    assert jnp.allclose(out, ref_f32, atol=2e-2, rtol=2e-2), \
        float(jnp.max(jnp.abs(out - ref_f32)))

    # Case 2: tiny DDPG-sized batch (B=4 < 8 sublane-pad path), bf16 weights.
    small = jax.random.normal(jax.random.PRNGKey(1), (4, state_dims), jnp.float32)
    out_s = jax.block_until_ready(
        actor_forward(small, params_bf16, max_action=max_action))
    ref_s = actor_forward_ref(small, params_f32, max_action=max_action)
    assert out_s.shape == (4, n_actions)
    assert jnp.allclose(out_s, ref_s, atol=2e-2, rtol=2e-2), \
        float(jnp.max(jnp.abs(out_s - ref_s)))

    # Case 3: f32-weight fallback (for use inside the critic's policy-gradient
    # path).  Tolerance stays loose because the XLA reference's default TPU
    # matmul precision is bf16-based.
    out_f = jax.block_until_ready(
        actor_forward(small, params_full, max_action=max_action))
    assert jnp.allclose(out_f, ref_s, atol=2e-2, rtol=2e-2), \
        float(jnp.max(jnp.abs(out_f - ref_s)))

    print("KERNEL_OK")
</pallas_src>

<mosaic_0001>
module attributes {stable_mosaic.version = 11 : i64} {
  func.func @_actor_kernel(%arg0: i32, %arg1: memref<152x16xf32, #tpu.memory_space<vmem>>, %arg2: memref<16x256xbf16, #tpu.memory_space<vmem>>, %arg3: memref<256x256xbf16, #tpu.memory_space<vmem>>, %arg4: memref<256x256xbf16, #tpu.memory_space<vmem>>, %arg5: memref<256x8xbf16, #tpu.memory_space<vmem>>, %arg6: memref<4x256xf32, #tpu.memory_space<vmem>>, %arg7: memref<152x8xf32, #tpu.memory_space<vmem>>) attributes {dimension_semantics = [#tpu.dimension_semantics<parallel>], iteration_bounds = array<i64: 2>, scalar_prefetch = 0 : i64, scratch_operands = 0 : i64, tpu.core_type = #tpu.core_type<tc>, window_params = [{transform_indices = @transform_0, window_bounds = array<i64: 152, 16>}, {pipeline_mode = #tpu.pipeline_mode<synchronous>, transform_indices = @transform_1, window_bounds = array<i64: 16, 256>}, {pipeline_mode = #tpu.pipeline_mode<synchronous>, transform_indices = @transform_2, window_bounds = array<i64: 256, 256>}, {pipeline_mode = #tpu.pipeline_mode<synchronous>, transform_indices = @transform_3, window_bounds = array<i64: 256, 256>}, {pipeline_mode = #tpu.pipeline_mode<synchronous>, transform_indices = @transform_4, window_bounds = array<i64: 256, 8>}, {pipeline_mode = #tpu.pipeline_mode<synchronous>, transform_indices = @transform_5, window_bounds = array<i64: 4, 256>}, {transform_indices = @transform_6, window_bounds = array<i64: 152, 8>}]} {
    %c0 = arith.constant 0 : index
    %c0_0 = arith.constant 0 : index
    %0 = vector.load %arg1[%c0, %c0_0] : memref<152x16xf32, #tpu.memory_space<vmem>>, vector<152x16xf32>
    %1 = arith.truncf %0 : vector<152x16xf32> to vector<152x16xbf16>
    %c0_1 = arith.constant 0 : index
    %c0_2 = arith.constant 0 : index
    %2 = vector.load %arg2[%c0_1, %c0_2] : memref<16x256xbf16, #tpu.memory_space<vmem>>, vector<16x256xbf16>
    %cst = arith.constant dense<0.000000e+00> : vector<152x256xf32>
    %3 = tpu.matmul %1, %2, %cst {dimension_numbers = #tpu.dot_dimension_numbers<[1], [0], [0], [1], [0, 0, 1, 1], [], []>} : vector<152x16xbf16>, vector<16x256xbf16>, vector<152x256xf32> -> vector<152x256xf32>
    %c0_3 = arith.constant 0 : index
    %c0_4 = arith.constant 0 : index
    %4 = vector.load %arg6[%c0_3, %c0_4] : memref<4x256xf32, #tpu.memory_space<vmem>>, vector<1x256xf32>
    %5 = vector.broadcast %4 : vector<1x256xf32> to vector<152x256xf32>
    %6 = arith.addf %3, %5 : vector<152x256xf32>
    %cst_5 = arith.constant 0.000000e+00 : f32
    %7 = vector.broadcast %cst_5 : f32 to vector<152x256xf32>
    %8 = arith.maximumf %6, %7 : vector<152x256xf32>
    %9 = arith.truncf %8 : vector<152x256xf32> to vector<152x256xbf16>
    %c0_6 = arith.constant 0 : index
    %c0_7 = arith.constant 0 : index
    %10 = vector.load %arg3[%c0_6, %c0_7] : memref<256x256xbf16, #tpu.memory_space<vmem>>, vector<256x256xbf16>
    %cst_8 = arith.constant dense<0.000000e+00> : vector<152x256xf32>
    %11 = tpu.matmul %9, %10, %cst_8 {dimension_numbers = #tpu.dot_dimension_numbers<[1], [0], [0], [1], [0, 0, 1, 1], [], []>} : vector<152x256xbf16>, vector<256x256xbf16>, vector<152x256xf32> -> vector<152x256xf32>
    %c1 = arith.constant 1 : index
    %c0_9 = arith.constant 0 : index
    %12 = vector.load %arg6[%c1, %c0_9] : memref<4x256xf32, #tpu.memory_space<vmem>>, vector<1x256xf32>
    %13 = vector.broadcast %12 : vector<1x256xf32> to vector<152x256xf32>
    %14 = arith.addf %11, %13 : vector<152x256xf32>
    %cst_10 = arith.constant 0.000000e+00 : f32
    %15 = vector.broadcast %cst_10 : f32 to vector<152x256xf32>
    %16 = arith.maximumf %14, %15 : vector<152x256xf32>
    %17 = arith.truncf %16 : vector<152x256xf32> to vector<152x256xbf16>
    %c0_11 = arith.constant 0 : index
    %c0_12 = arith.constant 0 : index
    %18 = vector.load %arg4[%c0_11, %c0_12] : memref<256x256xbf16, #tpu.memory_space<vmem>>, vector<256x256xbf16>
    %cst_13 = arith.constant dense<0.000000e+00> : vector<152x256xf32>
    %19 = tpu.matmul %17, %18, %cst_13 {dimension_numbers = #tpu.dot_dimension_numbers<[1], [0], [0], [1], [0, 0, 1, 1], [], []>} : vector<152x256xbf16>, vector<256x256xbf16>, vector<152x256xf32> -> vector<152x256xf32>
    %c2 = arith.constant 2 : index
    %c0_14 = arith.constant 0 : index
    %20 = vector.load %arg6[%c2, %c0_14] : memref<4x256xf32, #tpu.memory_space<vmem>>, vector<1x256xf32>
    %21 = vector.broadcast %20 : vector<1x256xf32> to vector<152x256xf32>
    %22 = arith.addf %19, %21 : vector<152x256xf32>
    %cst_15 = arith.constant 0.000000e+00 : f32
    %23 = vector.broadcast %cst_15 : f32 to vector<152x256xf32>
    %24 = arith.maximumf %22, %23 : vector<152x256xf32>
    %25 = arith.truncf %24 : vector<152x256xf32> to vector<152x256xbf16>
    %c0_16 = arith.constant 0 : index
    %c0_17 = arith.constant 0 : index
    %26 = vector.load %arg5[%c0_16, %c0_17] : memref<256x8xbf16, #tpu.memory_space<vmem>>, vector<256x8xbf16>
    %cst_18 = arith.constant dense<0.000000e+00> : vector<152x8xf32>
    %27 = tpu.matmul %25, %26, %cst_18 {dimension_numbers = #tpu.dot_dimension_numbers<[1], [0], [0], [1], [0, 0, 1, 1], [], []>} : vector<152x256xbf16>, vector<256x8xbf16>, vector<152x8xf32> -> vector<152x8xf32>
    %c3 = arith.constant 3 : index
    %c0_19 = arith.constant 0 : index
    %28 = vector.load %arg6[%c3, %c0_19] : memref<4x256xf32, #tpu.memory_space<vmem>>, vector<1x8xf32>
    %29 = vector.broadcast %28 : vector<1x8xf32> to vector<152x8xf32>
    %30 = arith.addf %27, %29 : vector<152x8xf32>
    %31 = math.tanh %30 : vector<152x8xf32>
    %cst_20 = arith.constant 1.000000e+00 : f32
    %32 = vector.broadcast %cst_20 : f32 to vector<152x8xf32>
    %33 = arith.mulf %31, %32 : vector<152x8xf32>
    %c0_21 = arith.constant 0 : index
    %c0_22 = arith.constant 0 : index
    %34 = vector.load %arg7[%c0_21, %c0_22] : memref<152x8xf32, #tpu.memory_space<vmem>>, vector<152x8xf32>
    tpu.vector_store %arg7[%c0_21, %c0_22], %33 {strides = array<i32>} : memref<152x8xf32, #tpu.memory_space<vmem>>, vector<152x8xf32>,
    return
  }
  func.func @transform_0(%arg0: i32) -> (i32, i32) {
    %c0_i32 = arith.constant 0 : i32
    %c0_i32_0 = arith.constant 0 : i32
    return %arg0, %c0_i32 : i32, i32
  }
  func.func @transform_1(%arg0: i32) -> (i32, i32) {
    %c0_i32 = arith.constant 0 : i32
    %c0_i32_0 = arith.constant 0 : i32
    %c0_i32_1 = arith.constant 0 : i32
    return %c0_i32, %c0_i32_0 : i32, i32
  }
  func.func @transform_2(%arg0: i32) -> (i32, i32) {
    %c0_i32 = arith.constant 0 : i32
    %c0_i32_0 = arith.constant 0 : i32
    %c0_i32_1 = arith.constant 0 : i32
    return %c0_i32, %c0_i32_0 : i32, i32
  }
  func.func @transform_3(%arg0: i32) -> (i32, i32) {
    %c0_i32 = arith.constant 0 : i32
    %c0_i32_0 = arith.constant 0 : i32
    %c0_i32_1 = arith.constant 0 : i32
    return %c0_i32, %c0_i32_0 : i32, i32
  }
  func.func @transform_4(%arg0: i32) -> (i32, i32) {
    %c0_i32 = arith.constant 0 : i32
    %c0_i32_0 = arith.constant 0 : i32
    %c0_i32_1 = arith.constant 0 : i32
    return %c0_i32, %c0_i32_0 : i32, i32
  }
  func.func @transform_5(%arg0: i32) -> (i32, i32) {
    %c0_i32 = arith.constant 0 : i32
    %c0_i32_0 = arith.constant 0 : i32
    %c0_i32_1 = arith.constant 0 : i32
    return %c0_i32, %c0_i32_0 : i32, i32
  }
  func.func @transform_6(%arg0: i32) -> (i32, i32) {
    %c0_i32 = arith.constant 0 : i32
    %c0_i32_0 = arith.constant 0 : i32
    return %arg0, %c0_i32 : i32, i32
  }
}

</mosaic_0001>

<llo_original>
// kernel: tpu_custom_call.1
$region0: #{tpu_custom_call.1}
  #allocation0 [shape = 'u32[]', space=smem, size = 0x4, offset = 0x4, fixed_abs, tag = 'smem constant byte address 0x4 - core index']
  #allocation1 [shape = 'u32[144,128]{1,0:T(1,128)}', space=vmem, size = 0x12000, scoped, tag = 'internal scratch']
  %s0 = inlined_call_operand.vmem [shape: f32[304,16], index: 0, kind: input, shape index: {}]
  %s1 = inlined_call_operand.vmem [shape: bf16[16,256], index: 1, kind: input, shape index: {}]
  %s2 = inlined_call_operand.vmem [shape: bf16[256,256], index: 2, kind: input, shape index: {}]
  %s3 = inlined_call_operand.hbm [shape: bf16[256,256], index: 3, kind: input, shape index: {}]
  %s4 = inlined_call_operand.vmem [shape: bf16[256,8], index: 4, kind: input, shape index: {}]
  %s5 = inlined_call_operand.vmem [shape: f32[4,256], index: 5, kind: input, shape index: {}]
  %s6 = inlined_call_operand.vmem [shape: f32[304,8], index: 6, kind: output, shape index: {}]
  %s7 = sld [smem:[#allocation0]]
  $region61: #{tpu_custom_call.1} parent=0
    _
  %s9 = ssub.s32 1, %s7
  %s10 = scalar_select 0, %s9, %s7
  $region1: #{tpu_custom_call.1} parent=0
    #allocation2 [shape = 'u8[131072]{0}', space=vmem, size = 0x20000, scoped, tag = 'input window, operand 3, single buffered']
    #allocation3 [shape = 's32[2]{0}', space=sflag, size = 0x8, scoped, tag = 'scoped memory for tpu_custom_call.1']
    %11 = vsyncpa [#allocation3], 0
    loop: start=0, step=1, limit=4
    $region2: #{tpu_custom_call.1} parent=1 // loop_pre_header
      _
    $region3: #{tpu_custom_call.1} parent=1 // loop_header
      %s13 = sphi 0, %s17
      %p14 = scmp.ge.s32.totalorder %s13, 4
      %s23 = sphi 0, %s25
      %s26 = sphi 0, %s23
      %s27 = sphi 0, %s26
      %s43 = sphi 0, %s27
      %s47 = sphi 0, %s47
      %s49 = sphi 0, %s47
      %s50 = sphi 0, %s49
      %s64 = sphi 0, %s50
      %s68 = sphi 0, %s68
      %s70 = sphi 0, %s68
      %s71 = sphi 0, %s70
      %s85 = sphi 0, %s71
      %s89 = sphi 0, %s89
      %s91 = sphi 0, %s89
      %s92 = sphi 0, %s91
      %s106 = sphi 0, %s92
      %s110 = sphi 0, %s110
      %s112 = sphi 0, %s110
      %s113 = sphi 0, %s112
      %s127 = sphi 0, %s113
      %s131 = sphi 0, %s131
      %s133 = sphi 0, %s131
      %s134 = sphi 0, %s133
      %s148 = sphi 0, %s134
      %s154 = sphi 0, %s156
      %s157 = sphi 0, %s154
      %s158 = sphi 0, %s157
      %s174 = sphi 0, %s158
    $region4: #{tpu_custom_call.1} parent=1 // loop_header_branch
      %16 = sbr.rel (%p14) target = $region8
    $region5: #{tpu_custom_call.1} parent=1 // loop_body
      %s18 = ssub.s32 %s13, 1
      %s19 = ssub.s32 %s13, 2
      %s20 = sadd.s32 %s13, 1
      %s21 = ssub.s32 %s13, %s20
      %p22 = scmp.eq.s32.totalorder %s21, 0
      %s24 = sadd.s32 %s23, 1
      %s25 = scalar_select %p22, %s23, %s24
      %p28 = pneg %p22
      %p29 = scmp.eq.s32.totalorder %s13, 1
      %p30 = por %p28, %p29
      %p31 = scmp.ne.s32.totalorder %s23, %s26
      %p32 = scmp.eq.s32.totalorder %s13, 0
      %p33 = por %p31, %p32
      %p34 = scmp.ne.s32.totalorder %s23, %s26
      %p35 = scmp.eq.s32.totalorder %s18, 1
      %p36 = por %p34, %p35
      %p37 = scmp.ne.s32.totalorder %s26, %s27
      %p38 = scmp.eq.s32.totalorder %s18, 0
      %p39 = por %p37, %p38
      %p40 = scmp.ne.s32.totalorder %s26, %s27
      %p41 = scmp.eq.s32.totalorder %s19, 1
      %p42 = por %p40, %p41
      %p44 = scmp.ne.s32.totalorder %s27, %s43
      %p45 = scmp.eq.s32.totalorder %s19, 0
      %p46 = por %p44, %p45
      %s48 = sadd.s32 %s47, 1
      %p51 = scmp.eq.s32.totalorder %s13, 1
      %p52 = scmp.ne.s32.totalorder %s47, %s49
      %p53 = scmp.eq.s32.totalorder %s13, 0
      %p54 = por %p52, %p53
      %p55 = scmp.ne.s32.totalorder %s47, %s49
      %p56 = scmp.eq.s32.totalorder %s18, 1
      %p57 = por %p55, %p56
      %p58 = scmp.ne.s32.totalorder %s49, %s50
      %p59 = scmp.eq.s32.totalorder %s18, 0
      %p60 = por %p58, %p59
      %p61 = scmp.ne.s32.totalorder %s49, %s50
      %p62 = scmp.eq.s32.totalorder %s19, 1
      %p63 = por %p61, %p62
      %p65 = scmp.ne.s32.totalorder %s50, %s64
      %p66 = scmp.eq.s32.totalorder %s19, 0
      %p67 = por %p65, %p66
      %s69 = sadd.s32 %s68, 1
      %p72 = scmp.eq.s32.totalorder %s13, 1
      %p73 = scmp.ne.s32.totalorder %s68, %s70
      %p74 = scmp.eq.s32.totalorder %s13, 0
      %p75 = por %p73, %p74
      %p76 = scmp.ne.s32.totalorder %s68, %s70
      %p77 = scmp.eq.s32.totalorder %s18, 1
      %p78 = por %p76, %p77
      %p79 = scmp.ne.s32.totalorder %s70, %s71
      %p80 = scmp.eq.s32.totalorder %s18, 0
      %p81 = por %p79, %p80
      %p82 = scmp.ne.s32.totalorder %s70, %s71
      %p83 = scmp.eq.s32.totalorder %s19, 1
      %p84 = por %p82, %p83
      %p86 = scmp.ne.s32.totalorder %s71, %s85
      %p87 = scmp.eq.s32.totalorder %s19, 0
      %p88 = por %p86, %p87
      %s90 = sadd.s32 %s89, 1
      %p93 = scmp.eq.s32.totalorder %s13, 1
      %p94 = scmp.ne.s32.totalorder %s89, %s91
      %p95 = scmp.eq.s32.totalorder %s13, 0
      %p96 = por %p94, %p95
      %p97 = scmp.ne.s32.totalorder %s89, %s91
      %p98 = scmp.eq.s32.totalorder %s18, 1
      %p99 = por %p97, %p98
      %p100 = scmp.ne.s32.totalorder %s91, %s92
      %p101 = scmp.eq.s32.totalorder %s18, 0
      %p102 = por %p100, %p101
      %p103 = scmp.ne.s32.totalorder %s91, %s92
      %p104 = scmp.eq.s32.totalorder %s19, 1
      %p105 = por %p103, %p104
      %p107 = scmp.ne.s32.totalorder %s92, %s106
      %p108 = scmp.eq.s32.totalorder %s19, 0
      %p109 = por %p107, %p108
      %s111 = sadd.s32 %s110, 1
      %p114 = scmp.eq.s32.totalorder %s13, 1
      %p115 = scmp.ne.s32.totalorder %s110, %s112
      %p116 = scmp.eq.s32.totalorder %s13, 0
      %p117 = por %p115, %p116
      %p118 = scmp.ne.s32.totalorder %s110, %s112
      %p119 = scmp.eq.s32.totalorder %s18, 1
      %p120 = por %p118, %p119
      %p121 = scmp.ne.s32.totalorder %s112, %s113
      %p122 = scmp.eq.s32.totalorder %s18, 0
      %p123 = por %p121, %p122
      %p124 = scmp.ne.s32.totalorder %s112, %s113
      %p125 = scmp.eq.s32.totalorder %s19, 1
      %p126 = por %p124, %p125
      %p128 = scmp.ne.s32.totalorder %s113, %s127
      %p129 = scmp.eq.s32.totalorder %s19, 0
      %p130 = por %p128, %p129
      %s132 = sadd.s32 %s131, 1
      %p135 = scmp.eq.s32.totalorder %s13, 1
      %p136 = scmp.ne.s32.totalorder %s131, %s133
      %p137 = scmp.eq.s32.totalorder %s13, 0
      %p138 = por %p136, %p137
      %p139 = scmp.ne.s32.totalorder %s131, %s133
      %p140 = scmp.eq.s32.totalorder %s18, 1
      %p141 = por %p139, %p140
      %p142 = scmp.ne.s32.totalorder %s133, %s134
      %p143 = scmp.eq.s32.totalorder %s18, 0
      %p144 = por %p142, %p143
      %p145 = scmp.ne.s32.totalorder %s133, %s134
      %p146 = scmp.eq.s32.totalorder %s19, 1
      %p147 = por %p145, %p146
      %p149 = scmp.ne.s32.totalorder %s134, %s148
      %p150 = scmp.eq.s32.totalorder %s19, 0
      %p151 = por %p149, %p150
      %s152 = ssub.s32 %s13, %s20
      %p153 = scmp.eq.s32.totalorder %s152, 0
      %s155 = sadd.s32 %s154, 1
      %s156 = scalar_select %p153, %s154, %s155
      %p159 = pneg %p153
      %p160 = scmp.eq.s32.totalorder %s13, 1
      %p161 = por %p159, %p160
      %p162 = scmp.ne.s32.totalorder %s154, %s157
      %p163 = scmp.eq.s32.totalorder %s13, 0
      %p164 = por %p162, %p163
      %p165 = scmp.ne.s32.totalorder %s154, %s157
      %p166 = scmp.eq.s32.totalorder %s18, 1
      %p167 = por %p165, %p166
      %p168 = scmp.ne.s32.totalorder %s157, %s158
      %p169 = scmp.eq.s32.totalorder %s18, 0
      %p170 = por %p168, %p169
      %p171 = scmp.ne.s32.totalorder %s157, %s158
      %p172 = scmp.eq.s32.totalorder %s19, 1
      %p173 = por %p171, %p172
      %p175 = scmp.ne.s32.totalorder %s158, %s174
      %p176 = scmp.eq.s32.totalorder %s19, 0
      %p177 = por %p175, %p176
      %p178 = scmp.le.s32.totalorder 1, %s13
      %p179 = scmp.lt.s32.totalorder %s13, 3
      %p180 = pnand %p178, %p179
      %p181 = pneg %p180
      // Predicated region
      $region9: #{tpu_custom_call.1} parent=5 // pred_check
        _
      $region10: #{tpu_custom_call.1} parent=5 // pred_check_branch
        %183 = sbr.rel (%p180) target = $region12
      $region11: #{tpu_custom_call.1} parent=5 // pred_region
        %s184 = ssub.s32 %s13, 1
        // Predicated region
        $region13: #{tpu_custom_call.1} parent=11 // pred_check
          %p185 = pneg %p60
        $region14: #{tpu_custom_call.1} parent=11 // pred_check_branch
          %187 = sbr.rel (%p185) target = $region16
        $region15: #{tpu_custom_call.1} parent=11 // pred_region
          _
        $region16: #{tpu_custom_call.1} parent=11 // pred_fallthru
          _
        // Predicated region
        $region17: #{tpu_custom_call.1} parent=11 // pred_check
          %p188 = pneg %p81
        $region18: #{tpu_custom_call.1} parent=11 // pred_check_branch
          %190 = sbr.rel (%p188) target = $region20
        $region19: #{tpu_custom_call.1} parent=11 // pred_region
          _
        $region20: #{tpu_custom_call.1} parent=11 // pred_fallthru
          _
        // Predicated region
        $region21: #{tpu_custom_call.1} parent=11 // pred_check
          %p191 = pneg %p102
        $region22: #{tpu_custom_call.1} parent=11 // pred_check_branch
          %193 = sbr.rel (%p191) target = $region24
        $region23: #{tpu_custom_call.1} parent=11 // pred_region
          %s195 = ssub.s32 4096, 4096
          %196 = vsyncadd [#allocation3], %s195
          %s197 = sshll.u32 [#allocation2], 4
          %s198 = int_to_ptr.vmem [resolvable:$true] %s197
          %203 = dma.hbm_to_vmem [thread:$0]  %s3, 4096, %s198, [#allocation3], 128, 128, 8
        $region24: #{tpu_custom_call.1} parent=11 // pred_fallthru
          _
        // Predicated region
        $region25: #{tpu_custom_call.1} parent=11 // pred_check
          %p204 = pneg %p123
        $region26: #{tpu_custom_call.1} parent=11 // pred_check_branch
          %206 = sbr.rel (%p204) target = $region28
        $region27: #{tpu_custom_call.1} parent=11 // pred_region
          _
        $region28: #{tpu_custom_call.1} parent=11 // pred_fallthru
          _
        // Predicated region
        $region29: #{tpu_custom_call.1} parent=11 // pred_check
          %p207 = pneg %p144
        $region30: #{tpu_custom_call.1} parent=11 // pred_check_branch
          %209 = sbr.rel (%p207) target = $region32
        $region31: #{tpu_custom_call.1} parent=11 // pred_region
          _
        $region32: #{tpu_custom_call.1} parent=11 // pred_fallthru
          _
      $region12: #{tpu_custom_call.1} parent=5 // pred_fallthru
        _
      %p210 = scmp.lt.s32.totalorder %s13, 2
      // Predicated region
      $region33: #{tpu_custom_call.1} parent=5 // pred_check
        %p211 = pneg %p210
      $region34: #{tpu_custom_call.1} parent=5 // pred_check_branch
        %213 = sbr.rel (%p211) target = $region36
      $region35: #{tpu_custom_call.1} parent=5 // pred_region
        // Predicated region
        $region37: #{tpu_custom_call.1} parent=35 // pred_check
          %p214 = pneg %p33
        $region38: #{tpu_custom_call.1} parent=35 // pred_check_branch
          %216 = sbr.rel (%p214) target = $region40
        $region39: #{tpu_custom_call.1} parent=35 // pred_region
          %s217 = smul.u32 19, %s13
          %p218 = scmp.lt.s32.totalorder %s217, 37
          %s219 = scalar_select %p218, %s217, 37
          %s220 = smul.addr %s219, 8
          %s221 = scalar_lea.vmem %s0, %s220
          %s222 = smul.u32 19, %s13
        $region40: #{tpu_custom_call.1} parent=35 // pred_fallthru
          _
      $region36: #{tpu_custom_call.1} parent=5 // pred_fallthru
        _
      %p223 = scmp.le.s32.totalorder 1, %s13
      %p224 = scmp.lt.s32.totalorder %s13, 3
      %p225 = pnand %p223, %p224
      %p226 = pneg %p225
      // Predicated region
      $region41: #{tpu_custom_call.1} parent=5 // pred_check
        _
      $region42: #{tpu_custom_call.1} parent=5 // pred_check_branch
        %228 = sbr.rel (%p225) target = $region44
      $region43: #{tpu_custom_call.1} parent=5 // pred_region
        %s229 = ssub.s32 %s13, 1
        // Predicated region
        $region45: #{tpu_custom_call.1} parent=43 // pred_check
          %p230 = pneg %p102
        $region46: #{tpu_custom_call.1} parent=43 // pred_check_branch
          %232 = sbr.rel (%p230) target = $region48
        $region47: #{tpu_custom_call.1} parent=43 // pred_region
          %233 = dma.done [#allocation3], 4096
        $region48: #{tpu_custom_call.1} parent=43 // pred_fallthru
          _
        %s234 = smul.u32 19, %s18
        %p235 = scmp.lt.s32.totalorder %s234, 37
        %s236 = scalar_select %p235, %s234, 37
        %s237 = smul.addr %s236, 8
        %s238 = scalar_lea.vmem %s0, %s237
        %p239 = pneg %p39
        %p240 = pneg %p36
        %p241 = pneg %p60
        %p242 = pneg %p57
        %p243 = pneg %p81
        %p244 = pneg %p78
        %p245 = pneg %p102
        %p246 = pneg %p99
        %p247 = pneg %p123
        %p248 = pneg %p120
        %p249 = pneg %p144
        %p250 = pneg %p141
        %p251 = pneg %p170
        %p252 = pneg %p167
        %s253 = smul.u32 19, %s18
        %p254 = scmp.lt.s32.totalorder %s253, 37
        %s255 = scalar_select %p254, %s253, 37
        %s256 = smul.addr %s255, 8
        %s257 = scalar_lea.vmem %s6, %s256
        %s258 = smul.u32 19, %s18
        %p259 = scmp.lt.s32.totalorder %s258, 37
        %s260 = scalar_select %p259, %s258, 37
        %s261 = smul.addr %s260, 8
        %s262 = scalar_lea.vmem %s0, %s261
        %s263 = smul.u32 19, %s18
        %s264 = smul.u32 19, %s18
        %p265 = scmp.lt.s32.totalorder %s264, 37
        %s266 = scalar_select %p265, %s264, 37
        %s267 = smul.addr %s266, 8
        %s268 = scalar_lea.vmem %s6, %s267
        %s269 = smul.u32 19, %s18
        %v271 = vld [vmem:[%s262] sm:$0xff]
        %v272 = vld [vmem:[%s262 + $0x8] sm:$0xff]
        %v273 = vld [vmem:[%s262 + $0x10] sm:$0xff]
        %v274 = vld [vmem:[%s262 + $0x18] sm:$0xff]
        %v275 = vld [vmem:[%s262 + $0x20] sm:$0xff]
        %v276 = vld [vmem:[%s262 + $0x28] sm:$0xff]
        %v277 = vld [vmem:[%s262 + $0x30] sm:$0xff]
        %v278 = vld [vmem:[%s262 + $0x38] sm:$0xff]
        %v279 = vld [vmem:[%s262 + $0x40] sm:$0xff]
        %v280 = vld [vmem:[%s262 + $0x48] sm:$0xff]
        %v281 = vld [vmem:[%s262 + $0x50] sm:$0xff]
        %v282 = vld [vmem:[%s262 + $0x58] sm:$0xff]
        %v283 = vld [vmem:[%s262 + $0x60] sm:$0xff]
        %v284 = vld [vmem:[%s262 + $0x68] sm:$0xff]
        %v285 = vld [vmem:[%s262 + $0x70] sm:$0xff]
        %v286 = vld [vmem:[%s262 + $0x78] sm:$0xff]
        %v287 = vld [vmem:[%s262 + $0x80] sm:$0xff]
        %v288 = vld [vmem:[%s262 + $0x88] sm:$0xff]
        %v289 = vld [vmem:[%s262 + $0x90] sm:$0xff]
        %v290 = vpack.c.bf16 %v272, %v271
        %v291 = vpack.c.bf16 %v274, %v273
        %v292 = vpack.c.bf16 %v276, %v275
        %v293 = vpack.c.bf16 %v278, %v277
        %v294 = vpack.c.bf16 %v280, %v279
        %v295 = vpack.c.bf16 %v282, %v281
        %v296 = vpack.c.bf16 %v284, %v283
        %v297 = vpack.c.bf16 %v286, %v285
        %v298 = vpack.c.bf16 %v288, %v287
        %v299 = vpack.c.bf16 %v289, %v289
        %v300 = vld [vmem:[%s1] sm:$0xff]
        %v301 = vld [vmem:[%s1 + $0x8] sm:$0xff]
        %v302 = vld [vmem:[%s5] ss:$4 sm:$0x3]
        %v304 = vlaneseq
        %v305 = vshrl.u32 %v304, 7
        %v306 = vsub.s32 0, %v305
        %v307 = vrot.slane %v302, %v306
        %v308 = vlaneseq
        %v309 = vshrl.u32 %v308, 7
        %v310 = vsub.s32 1, %v309
        %v311 = vrot.slane %v302, %v310
        %v316 = vunpack.c.l.b16 %v300
        %v317 = vunpack.c.h.b16 %v300
        %v318 = vunpack.c.l.b16 %v301
        %v319 = vunpack.c.h.b16 %v301
        %v320 = vpack.c.b16 %v318, %v316
        %v321 = vpack.c.b16 %v319, %v317
        %vm324 = vcmask 130048
        %v326 = vsel %vm324, %v290, 0
        %v329 = vsel %vm324, %v291, 0
        %v332 = vsel %vm324, %v292, 0
        %v335 = vsel %vm324, %v293, 0
        %v338 = vsel %vm324, %v294, 0
        %v341 = vsel %vm324, %v295, 0
        %v344 = vsel %vm324, %v296, 0
        %v347 = vsel %vm324, %v297, 0
        %v350 = vsel %vm324, %v298, 0
        %v353 = vsel %vm324, %v299, 0
        %355 = vmatprep.subr.bf16.mxu0 0
        %356 = vmatpush1.bf16.msra.mxu0 0
        %357 = vmatprep.subr.bf16.mxu0 0
        %358 = vmatpush1.bf16.msra.mxu0 0
        %359 = vmatprep.subr.bf16.mxu0 0
        %360 = vmatpush1.bf16.msra.mxu0 0
        %361 = vmatprep.subr.bf16.mxu0 0
        %362 = vmatpush1.bf16.msra.mxu0 0
        %363 = vmatprep.subr.bf16.mxu0 0
        %364 = vmatpush1.bf16.msra.mxu0 0
        %365 = vmatprep.subr.bf16.mxu0 0
        %366 = vmatpush1.bf16.msra.mxu0 0
        %367 = vmatprep.subr.bf16.mxu0 0
        %368 = vmatpush1.bf16.msra.mxu0 0
        %369 = vmatprep.subr.bf16.mxu0 %v321
        %370 = vmatpush1.bf16.msra.mxu0 %v320
        %371 = vmatprep.subr.bf16.mxu0 0
        %372 = vmatpush2.bf16.msra.mxu0 0
        %373 = vmatprep.subr.bf16.mxu0 0
        %374 = vmatpush2.bf16.msra.mxu0 0
        %375 = vmatprep.subr.bf16.mxu0 0
        %376 = vmatpush2.bf16.msra.mxu0 0
        %377 = vmatprep.subr.bf16.mxu0 0
        %378 = vmatpush2.bf16.msra.mxu0 0
        %379 = vmatprep.subr.bf16.mxu0 0
        %380 = vmatpush2.bf16.msra.mxu0 0
        %381 = vmatprep.subr.bf16.mxu0 0
        %382 = vmatpush2.bf16.msra.mxu0 0
        %383 = vmatprep.subr.bf16.mxu0 0
        %384 = vmatpush2.bf16.msra.mxu0 0
        %385 = vmatprep.subr.bf16.mxu0 0
        %386 = vmatpush2.bf16.msra.mxu0 0
        %387 = vmatprep.mubr.bf16.mxu0 0
        %388 = vmatmul.mubr.bf16.gmra.mxu0 %v326
        %v389 = vpop.f32.mrf.mxu0
        %v390 = vadd.f32 %v307, %v389
        %v391 = vpop.f32.mrf.mxu0
        %v392 = vadd.f32 %v311, %v391
        %v393 = vpop.f32.mrf.mxu0
        %v394 = vadd.f32 %v307, %v393
        %v395 = vpop.f32.mrf.mxu0
        %v396 = vadd.f32 %v311, %v395
        %397 = vmatprep.mubr.bf16.mxu0 0
        %398 = vmatmul.mubr.bf16.gmra.mxu0 %v329
        %v399 = vpop.f32.mrf.mxu0
        %v400 = vadd.f32 %v307, %v399
        %v401 = vpop.f32.mrf.mxu0
        %v402 = vadd.f32 %v311, %v401
        %v403 = vpop.f32.mrf.mxu0
        %v404 = vadd.f32 %v307, %v403
        %v405 = vpop.f32.mrf.mxu0
        %v406 = vadd.f32 %v311, %v405
        %407 = vmatprep.mubr.bf16.mxu0 0
        %408 = vmatmul.mubr.bf16.gmra.mxu0 %v332
        %v409 = vpop.f32.mrf.mxu0
        %v410 = vadd.f32 %v307, %v409
        %v411 = vpop.f32.mrf.mxu0
        %v412 = vadd.f32 %v311, %v411
        %v413 = vpop.f32.mrf.mxu0
        %v414 = vadd.f32 %v307, %v413
        %v415 = vpop.f32.mrf.mxu0
        %v416 = vadd.f32 %v311, %v415
        %417 = vmatprep.mubr.bf16.mxu0 0
        %418 = vmatmul.mubr.bf16.gmra.mxu0 %v335
        %v419 = vpop.f32.mrf.mxu0
        %v420 = vadd.f32 %v307, %v419
        %v421 = vpop.f32.mrf.mxu0
        %v422 = vadd.f32 %v311, %v421
        %v423 = vpop.f32.mrf.mxu0
        %v424 = vadd.f32 %v307, %v423
        %v425 = vpop.f32.mrf.mxu0
        %v426 = vadd.f32 %v311, %v425
        %427 = vmatprep.mubr.bf16.mxu0 0
        %428 = vmatmul.mubr.bf16.gmra.mxu0 %v338
        %v429 = vpop.f32.mrf.mxu0
        %v430 = vadd.f32 %v307, %v429
        %v431 = vpop.f32.mrf.mxu0
        %v432 = vadd.f32 %v311, %v431
        %v433 = vpop.f32.mrf.mxu0
        %v434 = vadd.f32 %v307, %v433
        %v435 = vpop.f32.mrf.mxu0
        %v436 = vadd.f32 %v311, %v435
        %437 = vmatprep.mubr.bf16.mxu0 0
        %438 = vmatmul.mubr.bf16.gmra.mxu0 %v341
        %v439 = vpop.f32.mrf.mxu0
        %v440 = vadd.f32 %v307, %v439
        %v441 = vpop.f32.mrf.mxu0
        %v442 = vadd.f32 %v311, %v441
        %v443 = vpop.f32.mrf.mxu0
        %v444 = vadd.f32 %v307, %v443
        %v445 = vpop.f32.mrf.mxu0
        %v446 = vadd.f32 %v311, %v445
        %447 = vmatprep.mubr.bf16.mxu0 0
        %448 = vmatmul.mubr.bf16.gmra.mxu0 %v344
        %v449 = vpop.f32.mrf.mxu0
        %v450 = vadd.f32 %v307, %v449
        %v451 = vpop.f32.mrf.mxu0
        %v452 = vadd.f32 %v311, %v451
        %v453 = vpop.f32.mrf.mxu0
        %v454 = vadd.f32 %v307, %v453
        %v455 = vpop.f32.mrf.mxu0
        %v456 = vadd.f32 %v311, %v455
        %457 = vmatprep.mubr.bf16.mxu0 0
        %458 = vmatmul.mubr.bf16.gmra.mxu0 %v347
        %v459 = vpop.f32.mrf.mxu0
        %v460 = vadd.f32 %v307, %v459
        %v461 = vpop.f32.mrf.mxu0
        %v462 = vadd.f32 %v311, %v461
        %v463 = vpop.f32.mrf.mxu0
        %v464 = vadd.f32 %v307, %v463
        %v465 = vpop.f32.mrf.mxu0
        %v466 = vadd.f32 %v311, %v465
        %467 = vmatprep.mubr.bf16.mxu0 0
        %468 = vmatmul.mubr.bf16.gmra.mxu0 %v350
        %v469 = vpop.f32.mrf.mxu0
        %v470 = vadd.f32 %v307, %v469
        %v471 = vpop.f32.mrf.mxu0
        %v472 = vadd.f32 %v311, %v471
        %v473 = vpop.f32.mrf.mxu0
        %v474 = vadd.f32 %v307, %v473
        %v475 = vpop.f32.mrf.mxu0
        %v476 = vadd.f32 %v311, %v475
        %477 = vmatprep.mubr.bf16.mxu0 0
        %478 = vmatmul.mubr.bf16.gmra.mxu0 %v353
        %v479 = vpop.f32.mrf.mxu0
        %v480 = vadd.f32 %v307, %v479
        %v481 = vpop.f32.mrf.mxu0
        %v482 = vadd.f32 %v311, %v481
        %v483 = vpop.f32.mrf.mxu0
        %v484 = vpop.f32.mrf.mxu0
        %485 = vdwg.mxu0
        %v486 = vmax.f32 %v390, 0.0
        %v487 = vmax.f32 %v392, 0.0
        %v488 = vmax.f32 %v394, 0.0
        %v489 = vmax.f32 %v396, 0.0
        %v490 = vmax.f32 %v400, 0.0
        %v491 = vmax.f32 %v402, 0.0
        %v492 = vmax.f32 %v404, 0.0
        %v493 = vmax.f32 %v406, 0.0
        %v494 = vmax.f32 %v410, 0.0
        %v495 = vmax.f32 %v412, 0.0
        %v496 = vmax.f32 %v414, 0.0
        %v497 = vmax.f32 %v416, 0.0
        %v498 = vmax.f32 %v420, 0.0
        %v499 = vmax.f32 %v422, 0.0
        %v500 = vmax.f32 %v424, 0.0
        %v501 = vmax.f32 %v426, 0.0
        %v502 = vmax.f32 %v430, 0.0
        %v503 = vmax.f32 %v432, 0.0
        %v504 = vmax.f32 %v434, 0.0
        %v505 = vmax.f32 %v436, 0.0
        %v506 = vmax.f32 %v440, 0.0
        %v507 = vmax.f32 %v442, 0.0
        %v508 = vmax.f32 %v444, 0.0
        %v509 = vmax.f32 %v446, 0.0
        %v510 = vmax.f32 %v450, 0.0
        %v511 = vmax.f32 %v452, 0.0
        %v512 = vmax.f32 %v454, 0.0
        %v513 = vmax.f32 %v456, 0.0
        %v514 = vmax.f32 %v460, 0.0
        %v515 = vmax.f32 %v462, 0.0
        %v516 = vmax.f32 %v464, 0.0
        %v517 = vmax.f32 %v466, 0.0
        %v518 = vmax.f32 %v470, 0.0
        %v519 = vmax.f32 %v472, 0.0
        %v520 = vmax.f32 %v474, 0.0
        %v521 = vmax.f32 %v476, 0.0
        %v522 = vmax.f32 %v480, 0.0
        %v523 = vmax.f32 %v482, 0.0
        %v524 = vpack.c.bf16 %v488, %v486
        %v525 = vpack.c.bf16 %v489, %v487
        %v526 = vpack.c.bf16 %v492, %v490
        %v527 = vpack.c.bf16 %v493, %v491
        %v528 = vpack.c.bf16 %v496, %v494
        %v529 = vpack.c.bf16 %v497, %v495
        %v530 = vpack.c.bf16 %v500, %v498
        %v531 = vpack.c.bf16 %v501, %v499
        %v532 = vpack.c.bf16 %v504, %v502
        %v533 = vpack.c.bf16 %v505, %v503
        %v534 = vpack.c.bf16 %v508, %v506
        %v535 = vpack.c.bf16 %v509, %v507
        %v536 = vpack.c.bf16 %v512, %v510
        %v537 = vpack.c.bf16 %v513, %v511
        %v538 = vpack.c.bf16 %v516, %v514
        %v539 = vpack.c.bf16 %v517, %v515
        %v540 = vpack.c.bf16 %v520, %v518
        %v541 = vpack.c.bf16 %v521, %v519
        %v542 = vpack.c.bf16 %v522, %v522
        %v543 = vpack.c.bf16 %v523, %v523
        %v544 = vld [vmem:[%s2] sm:$0xff]
        %v545 = vld [vmem:[%s2 + $0x8] sm:$0xff]
        %v546 = vld [vmem:[%s2 + $0x10] sm:$0xff]
        %v547 = vld [vmem:[%s2 + $0x18] sm:$0xff]
        %v548 = vld [vmem:[%s2 + $0x20] sm:$0xff]
        %v549 = vld [vmem:[%s2 + $0x28] sm:$0xff]
        %v550 = vld [vmem:[%s2 + $0x30] sm:$0xff]
        %v551 = vld [vmem:[%s2 + $0x38] sm:$0xff]
        %v552 = vld [vmem:[%s2 + $0x40] sm:$0xff]
        %v553 = vld [vmem:[%s2 + $0x48] sm:$0xff]
        %v554 = vld [vmem:[%s2 + $0x50] sm:$0xff]
        %v555 = vld [vmem:[%s2 + $0x58] sm:$0xff]
        %v556 = vld [vmem:[%s2 + $0x60] sm:$0xff]
        %v557 = vld [vmem:[%s2 + $0x68] sm:$0xff]
        %v558 = vld [vmem:[%s2 + $0x70] sm:$0xff]
        %v559 = vld [vmem:[%s2 + $0x78] sm:$0xff]
        %v560 = vld [vmem:[%s2 + $0x80] sm:$0xff]
        %v561 = vld [vmem:[%s2 + $0x88] sm:$0xff]
        %v562 = vld [vmem:[%s2 + $0x90] sm:$0xff]
        %v563 = vld [vmem:[%s2 + $0x98] sm:$0xff]
        %v564 = vld [vmem:[%s2 + $0xa0] sm:$0xff]
        %v565 = vld [vmem:[%s2 + $0xa8] sm:$0xff]
        %v566 = vld [vmem:[%s2 + $0xb0] sm:$0xff]
        %v567 = vld [vmem:[%s2 + $0xb8] sm:$0xff]
        %v568 = vld [vmem:[%s2 + $0xc0] sm:$0xff]
        %v569 = vld [vmem:[%s2 + $0xc8] sm:$0xff]
        %v570 = vld [vmem:[%s2 + $0xd0] sm:$0xff]
        %v571 = vld [vmem:[%s2 + $0xd8] sm:$0xff]
        %v572 = vld [vmem:[%s2 + $0xe0] sm:$0xff]
        %v573 = vld [vmem:[%s2 + $0xe8] sm:$0xff]
        %v574 = vld [vmem:[%s2 + $0xf0] sm:$0xff]
        %v575 = vld [vmem:[%s2 + $0xf8] sm:$0xff]
        %s576 = scalar_lea.vmem %s5, 1
        %v577 = vld [vmem:[%s576] ss:$4 sm:$0x3]
        %v579 = vlaneseq
        %v580 = vshrl.u32 %v579, 7
        %v581 = vsub.s32 0, %v580
        %v582 = vrot.slane %v577, %v581
        %v583 = vlaneseq
        %v584 = vshrl.u32 %v583, 7
        %v585 = vsub.s32 1, %v584
        %v586 = vrot.slane %v577, %v585
        %v621 = vunpack.c.l.b16 %v544
        %v622 = vunpack.c.h.b16 %v544
        %v623 = vunpack.c.l.b16 %v545
        %v624 = vunpack.c.h.b16 %v545
        %v625 = vunpack.c.l.b16 %v546
        %v626 = vunpack.c.h.b16 %v546
        %v627 = vunpack.c.l.b16 %v547
        %v628 = vunpack.c.h.b16 %v547
        %v629 = vunpack.c.l.b16 %v548
        %v630 = vunpack.c.h.b16 %v548
        %v631 = vunpack.c.l.b16 %v549
        %v632 = vunpack.c.h.b16 %v549
        %v633 = vunpack.c.l.b16 %v550
        %v634 = vunpack.c.h.b16 %v550
        %v635 = vunpack.c.l.b16 %v551
        %v636 = vunpack.c.h.b16 %v551
        %v637 = vunpack.c.l.b16 %v552
        %v638 = vunpack.c.h.b16 %v552
        %v639 = vunpack.c.l.b16 %v553
        %v640 = vunpack.c.h.b16 %v553
        %v641 = vunpack.c.l.b16 %v554
        %v642 = vunpack.c.h.b16 %v554
        %v643 = vunpack.c.l.b16 %v555
        %v644 = vunpack.c.h.b16 %v555
        %v645 = vunpack.c.l.b16 %v556
        %v646 = vunpack.c.h.b16 %v556
        %v647 = vunpack.c.l.b16 %v557
        %v648 = vunpack.c.h.b16 %v557
        %v649 = vunpack.c.l.b16 %v558
        %v650 = vunpack.c.h.b16 %v558
        %v651 = vunpack.c.l.b16 %v559
        %v652 = vunpack.c.h.b16 %v559
        %v653 = vunpack.c.l.b16 %v560
        %v654 = vunpack.c.h.b16 %v560
        %v655 = vunpack.c.l.b16 %v561
        %v656 = vunpack.c.h.b16 %v561
        %v657 = vunpack.c.l.b16 %v562
        %v658 = vunpack.c.h.b16 %v562
        %v659 = vunpack.c.l.b16 %v563
        %v660 = vunpack.c.h.b16 %v563
        %v661 = vunpack.c.l.b16 %v564
        %v662 = vunpack.c.h.b16 %v564
        %v663 = vunpack.c.l.b16 %v565
        %v664 = vunpack.c.h.b16 %v565
        %v665 = vunpack.c.l.b16 %v566
        %v666 = vunpack.c.h.b16 %v566
        %v667 = vunpack.c.l.b16 %v567
        %v668 = vunpack.c.h.b16 %v567
        %v669 = vunpack.c.l.b16 %v568
        %v670 = vunpack.c.h.b16 %v568
        %v671 = vunpack.c.l.b16 %v569
        %v672 = vunpack.c.h.b16 %v569
        %v673 = vunpack.c.l.b16 %v570
        %v674 = vunpack.c.h.b16 %v570
        %v675 = vunpack.c.l.b16 %v571
        %v676 = vunpack.c.h.b16 %v571
        %v677 = vunpack.c.l.b16 %v572
        %v678 = vunpack.c.h.b16 %v572
        %v679 = vunpack.c.l.b16 %v573
        %v680 = vunpack.c.h.b16 %v573
        %v681 = vunpack.c.l.b16 %v574
        %v682 = vunpack.c.h.b16 %v574
        %v683 = vunpack.c.l.b16 %v575
        %v684 = vunpack.c.h.b16 %v575
        %v685 = vpack.c.b16 %v623, %v621
        %v686 = vpack.c.b16 %v624, %v622
        %v687 = vpack.c.b16 %v627, %v625
        %v688 = vpack.c.b16 %v628, %v626
        %v689 = vpack.c.b16 %v631, %v629
        %v690 = vpack.c.b16 %v632, %v630
        %v691 = vpack.c.b16 %v635, %v633
        %v692 = vpack.c.b16 %v636, %v634
        %v693 = vpack.c.b16 %v639, %v637
        %v694 = vpack.c.b16 %v640, %v638
        %v695 = vpack.c.b16 %v643, %v641
        %v696 = vpack.c.b16 %v644, %v642
        %v697 = vpack.c.b16 %v647, %v645
        %v698 = vpack.c.b16 %v648, %v646
        %v699 = vpack.c.b16 %v651, %v649
        %v700 = vpack.c.b16 %v652, %v650
        %v701 = vpack.c.b16 %v655, %v653
        %v702 = vpack.c.b16 %v656, %v654
        %v703 = vpack.c.b16 %v659, %v657
        %v704 = vpack.c.b16 %v660, %v658
        %v705 = vpack.c.b16 %v663, %v661
        %v706 = vpack.c.b16 %v664, %v662
        %v707 = vpack.c.b16 %v667, %v665
        %v708 = vpack.c.b16 %v668, %v666
        %v709 = vpack.c.b16 %v671, %v669
        %v710 = vpack.c.b16 %v672, %v670
        %v711 = vpack.c.b16 %v675, %v673
        %v712 = vpack.c.b16 %v676, %v674
        %v713 = vpack.c.b16 %v679, %v677
        %v714 = vpack.c.b16 %v680, %v678
        %v715 = vpack.c.b16 %v683, %v681
        %v716 = vpack.c.b16 %v684, %v682
        %749 = vmatprep.subr.bf16.mxu0 %v700
        %750 = vmatpush1.bf16.msra.mxu0 %v699
        %751 = vmatprep.subr.bf16.mxu0 %v698
        %752 = vmatpush1.bf16.msra.mxu0 %v697
        %753 = vmatprep.subr.bf16.mxu0 %v696
        %754 = vmatpush1.bf16.msra.mxu0 %v695
        %755 = vmatprep.subr.bf16.mxu0 %v694
        %756 = vmatpush1.bf16.msra.mxu0 %v693
        %757 = vmatprep.subr.bf16.mxu0 %v692
        %758 = vmatpush1.bf16.msra.mxu0 %v691
        %759 = vmatprep.subr.bf16.mxu0 %v690
        %760 = vmatpush1.bf16.msra.mxu0 %v689
        %761 = vmatprep.subr.bf16.mxu0 %v688
        %762 = vmatpush1.bf16.msra.mxu0 %v687
        %763 = vmatprep.subr.bf16.mxu0 %v686
        %764 = vmatpush1.bf16.msra.mxu0 %v685
        %765 = vmatprep.subr.bf16.mxu0 %v716
        %766 = vmatpush2.bf16.msra.mxu0 %v715
        %767 = vmatprep.subr.bf16.mxu0 %v714
        %768 = vmatpush2.bf16.msra.mxu0 %v713
        %769 = vmatprep.subr.bf16.mxu0 %v712
        %770 = vmatpush2.bf16.msra.mxu0 %v711
        %771 = vmatprep.subr.bf16.mxu0 %v710
        %772 = vmatpush2.bf16.msra.mxu0 %v709
        %773 = vmatprep.subr.bf16.mxu0 %v708
        %774 = vmatpush2.bf16.msra.mxu0 %v707
        %775 = vmatprep.subr.bf16.mxu0 %v706
        %776 = vmatpush2.bf16.msra.mxu0 %v705
        %777 = vmatprep.subr.bf16.mxu0 %v704
        %778 = vmatpush2.bf16.msra.mxu0 %v703
        %779 = vmatprep.subr.bf16.mxu0 %v702
        %780 = vmatpush2.bf16.msra.mxu0 %v701
        %781 = vmatprep.mubr.bf16.mxu0 %v525
        %782 = vmatmul.mubr.bf16.gmra.mxu0 %v524
        %v783 = vpop.f32.mrf.mxu0
        %v784 = vadd.f32 %v582, %v783
        %v785 = vpop.f32.mrf.mxu0
        %v786 = vadd.f32 %v586, %v785
        %v787 = vpop.f32.mrf.mxu0
        %v788 = vadd.f32 %v582, %v787
        %v789 = vpop.f32.mrf.mxu0
        %v790 = vadd.f32 %v586, %v789
        %791 = vmatprep.mubr.bf16.mxu0 %v527
        %792 = vmatmul.mubr.bf16.gmra.mxu0 %v526
        %v793 = vpop.f32.mrf.mxu0
        %v794 = vadd.f32 %v582, %v793
        %v795 = vpop.f32.mrf.mxu0
        %v796 = vadd.f32 %v586, %v795
        %v797 = vpop.f32.mrf.mxu0
        %v798 = vadd.f32 %v582, %v797
        %v799 = vpop.f32.mrf.mxu0
        %v800 = vadd.f32 %v586, %v799
        %801 = vmatprep.mubr.bf16.mxu0 %v529
        %802 = vmatmul.mubr.bf16.gmra.mxu0 %v528
        %v803 = vpop.f32.mrf.mxu0
        %v804 = vadd.f32 %v582, %v803
        %v805 = vpop.f32.mrf.mxu0
        %v806 = vadd.f32 %v586, %v805
        %v807 = vpop.f32.mrf.mxu0
        %v808 = vadd.f32 %v582, %v807
        %v809 = vpop.f32.mrf.mxu0
        %v810 = vadd.f32 %v586, %v809
        %811 = vmatprep.mubr.bf16.mxu0 %v531
        %812 = vmatmul.mubr.bf16.gmra.mxu0 %v530
        %v813 = vpop.f32.mrf.mxu0
        %v814 = vadd.f32 %v582, %v813
        %v815 = vpop.f32.mrf.mxu0
        %v816 = vadd.f32 %v586, %v815
        %v817 = vpop.f32.mrf.mxu0
        %v818 = vadd.f32 %v582, %v817
        %v819 = vpop.f32.mrf.mxu0
        %v820 = vadd.f32 %v586, %v819
        %821 = vmatprep.mubr.bf16.mxu0 %v533
        %822 = vmatmul.mubr.bf16.gmra.mxu0 %v532
        %v823 = vpop.f32.mrf.mxu0
        %v824 = vadd.f32 %v582, %v823
        %v825 = vpop.f32.mrf.mxu0
        %v826 = vadd.f32 %v586, %v825
        %v827 = vpop.f32.mrf.mxu0
        %v828 = vadd.f32 %v582, %v827
        %v829 = vpop.f32.mrf.mxu0
        %v830 = vadd.f32 %v586, %v829
        %831 = vmatprep.mubr.bf16.mxu0 %v535
        %832 = vmatmul.mubr.bf16.gmra.mxu0 %v534
        %v833 = vpop.f32.mrf.mxu0
        %v834 = vadd.f32 %v582, %v833
        %v835 = vpop.f32.mrf.mxu0
        %v836 = vadd.f32 %v586, %v835
        %v837 = vpop.f32.mrf.mxu0
        %v838 = vadd.f32 %v582, %v837
        %v839 = vpop.f32.mrf.mxu0
        %v840 = vadd.f32 %v586, %v839
        %841 = vmatprep.mubr.bf16.mxu0 %v537
        %842 = vmatmul.mubr.bf16.gmra.mxu0 %v536
        %v843 = vpop.f32.mrf.mxu0
        %v844 = vadd.f32 %v582, %v843
        %v845 = vpop.f32.mrf.mxu0
        %v846 = vadd.f32 %v586, %v845
        %v847 = vpop.f32.mrf.mxu0
        %v848 = vadd.f32 %v582, %v847
        %v849 = vpop.f32.mrf.mxu0
        %v850 = vadd.f32 %v586, %v849
        %851 = vmatprep.mubr.bf16.mxu0 %v539
        %852 = vmatmul.mubr.bf16.gmra.mxu0 %v538
        %v853 = vpop.f32.mrf.mxu0
        %v854 = vadd.f32 %v582, %v853
        %v855 = vpop.f32.mrf.mxu0
        %v856 = vadd.f32 %v586, %v855
        %v857 = vpop.f32.mrf.mxu0
        %v858 = vadd.f32 %v582, %v857
        %v859 = vpop.f32.mrf.mxu0
        %v860 = vadd.f32 %v586, %v859
        %861 = vmatprep.mubr.bf16.mxu0 %v541
        %862 = vmatmul.mubr.bf16.gmra.mxu0 %v540
        %v863 = vpop.f32.mrf.mxu0
        %v864 = vadd.f32 %v582, %v863
        %v865 = vpop.f32.mrf.mxu0
        %v866 = vadd.f32 %v586, %v865
        %v867 = vpop.f32.mrf.mxu0
        %v868 = vadd.f32 %v582, %v867
        %v869 = vpop.f32.mrf.mxu0
        %v870 = vadd.f32 %v586, %v869
        %871 = vmatprep.mubr.bf16.mxu0 %v543
        %872 = vmatmul.mubr.bf16.gmra.mxu0 %v542
        %v873 = vpop.f32.mrf.mxu0
        %v874 = vadd.f32 %v582, %v873
        %v875 = vpop.f32.mrf.mxu0
        %v876 = vadd.f32 %v586, %v875
        %v877 = vpop.f32.mrf.mxu0
        %v878 = vpop.f32.mrf.mxu0
        %879 = vdwg.mxu0
        %v880 = vmax.f32 %v784, 0.0
        %v881 = vmax.f32 %v786, 0.0
        %v882 = vmax.f32 %v788, 0.0
        %v883 = vmax.f32 %v790, 0.0
        %v884 = vmax.f32 %v794, 0.0
        %v885 = vmax.f32 %v796, 0.0
        %v886 = vmax.f32 %v798, 0.0
        %v887 = vmax.f32 %v800, 0.0
        %v888 = vmax.f32 %v804, 0.0
        %v889 = vmax.f32 %v806, 0.0
        %v890 = vmax.f32 %v808, 0.0
        %v891 = vmax.f32 %v810, 0.0
        %v892 = vmax.f32 %v814, 0.0
        %v893 = vmax.f32 %v816, 0.0
        %v894 = vmax.f32 %v818, 0.0
        %v895 = vmax.f32 %v820, 0.0
        %v896 = vmax.f32 %v824, 0.0
        %v897 = vmax.f32 %v826, 0.0
        %v898 = vmax.f32 %v828, 0.0
        %v899 = vmax.f32 %v830, 0.0
        %v900 = vmax.f32 %v834, 0.0
        %v901 = vmax.f32 %v836, 0.0
        %v902 = vmax.f32 %v838, 0.0
        %v903 = vmax.f32 %v840, 0.0
        %v904 = vmax.f32 %v844, 0.0
        %v905 = vmax.f32 %v846, 0.0
        %v906 = vmax.f32 %v848, 0.0
        %v907 = vmax.f32 %v850, 0.0
        %v908 = vmax.f32 %v854, 0.0
        %v909 = vmax.f32 %v856, 0.0
        %v910 = vmax.f32 %v858, 0.0
        %v911 = vmax.f32 %v860, 0.0
        %v912 = vmax.f32 %v864, 0.0
        %v913 = vmax.f32 %v866, 0.0
        %v914 = vmax.f32 %v868, 0.0
        %v915 = vmax.f32 %v870, 0.0
        %v916 = vmax.f32 %v874, 0.0
        %v917 = vmax.f32 %v876, 0.0
        %v918 = vpack.c.bf16 %v882, %v880
        %v919 = vpack.c.bf16 %v883, %v881
        %v920 = vpack.c.bf16 %v886, %v884
        %v921 = vpack.c.bf16 %v887, %v885
        %v922 = vpack.c.bf16 %v890, %v888
        %v923 = vpack.c.bf16 %v891, %v889
        %v924 = vpack.c.bf16 %v894, %v892
        %v925 = vpack.c.bf16 %v895, %v893
        %v926 = vpack.c.bf16 %v898, %v896
        %v927 = vpack.c.bf16 %v899, %v897
        %v928 = vpack.c.bf16 %v902, %v900
        %v929 = vpack.c.bf16 %v903, %v901
        %v930 = vpack.c.bf16 %v906, %v904
        %v931 = vpack.c.bf16 %v907, %v905
        %v932 = vpack.c.bf16 %v910, %v908
        %v933 = vpack.c.bf16 %v911, %v909
        %v934 = vpack.c.bf16 %v914, %v912
        %v935 = vpack.c.bf16 %v915, %v913
        %v936 = vpack.c.bf16 %v916, %v916
        %v937 = vpack.c.bf16 %v917, %v917
        %v938 = vld [vmem:[#allocation2] sm:$0xff]
        %v939 = vld [vmem:[#allocation2 + $0x8] sm:$0xff]
        %v940 = vld [vmem:[#allocation2 + $0x10] sm:$0xff]
        %v941 = vld [vmem:[#allocation2 + $0x18] sm:$0xff]
        %v942 = vld [vmem:[#allocation2 + $0x20] sm:$0xff]
        %v943 = vld [vmem:[#allocation2 + $0x28] sm:$0xff]
        %v944 = vld [vmem:[#allocation2 + $0x30] sm:$0xff]
        %v945 = vld [vmem:[#allocation2 + $0x38] sm:$0xff]
        %v946 = vld [vmem:[#allocation2 + $0x40] sm:$0xff]
        %v947 = vld [vmem:[#allocation2 + $0x48] sm:$0xff]
        %v948 = vld [vmem:[#allocation2 + $0x50] sm:$0xff]
        %v949 = vld [vmem:[#allocation2 + $0x58] sm:$0xff]
        %v950 = vld [vmem:[#allocation2 + $0x60] sm:$0xff]
        %v951 = vld [vmem:[#allocation2 + $0x68] sm:$0xff]
        %v952 = vld [vmem:[#allocation2 + $0x70] sm:$0xff]
        %v953 = vld [vmem:[#allocation2 + $0x78] sm:$0xff]
        %v954 = vld [vmem:[#allocation2 + $0x80] sm:$0xff]
        %v955 = vld [vmem:[#allocation2 + $0x88] sm:$0xff]
        %v956 = vld [vmem:[#allocation2 + $0x90] sm:$0xff]
        %v957 = vld [vmem:[#allocation2 + $0x98] sm:$0xff]
        %v958 = vld [vmem:[#allocation2 + $0xa0] sm:$0xff]
        %v959 = vld [vmem:[#allocation2 + $0xa8] sm:$0xff]
        %v960 = vld [vmem:[#allocation2 + $0xb0] sm:$0xff]
        %v961 = vld [vmem:[#allocation2 + $0xb8] sm:$0xff]
        %v962 = vld [vmem:[#allocation2 + $0xc0] sm:$0xff]
        %v963 = vld [vmem:[#allocation2 + $0xc8] sm:$0xff]
        %v964 = vld [vmem:[#allocation2 + $0xd0] sm:$0xff]
        %v965 = vld [vmem:[#allocation2 + $0xd8] sm:$0xff]
        %v966 = vld [vmem:[#allocation2 + $0xe0] sm:$0xff]
        %v967 = vld [vmem:[#allocation2 + $0xe8] sm:$0xff]
        %v968 = vld [vmem:[#allocation2 + $0xf0] sm:$0xff]
        %v969 = vld [vmem:[#allocation2 + $0xf8] sm:$0xff]
        %s970 = scalar_lea.vmem %s5, 2
        %v971 = vld [vmem:[%s970] ss:$4 sm:$0x3]
        %v973 = vlaneseq
        %v974 = vshrl.u32 %v973, 7
        %v975 = vsub.s32 0, %v974
        %v976 = vrot.slane %v971, %v975
        %v977 = vlaneseq
        %v978 = vshrl.u32 %v977, 7
        %v979 = vsub.s32 1, %v978
        %v980 = vrot.slane %v971, %v979
        %v1015 = vunpack.c.l.b16 %v938
        %v1016 = vunpack.c.h.b16 %v938
        %v1017 = vunpack.c.l.b16 %v939
        %v1018 = vunpack.c.h.b16 %v939
        %v1019 = vunpack.c.l.b16 %v940
        %v1020 = vunpack.c.h.b16 %v940
        %v1021 = vunpack.c.l.b16 %v941
        %v1022 = vunpack.c.h.b16 %v941
        %v1023 = vunpack.c.l.b16 %v942
        %v1024 = vunpack.c.h.b16 %v942
        %v1025 = vunpack.c.l.b16 %v943
        %v1026 = vunpack.c.h.b16 %v943
        %v1027 = vunpack.c.l.b16 %v944
        %v1028 = vunpack.c.h.b16 %v944
        %v1029 = vunpack.c.l.b16 %v945
        %v1030 = vunpack.c.h.b16 %v945
        %v1031 = vunpack.c.l.b16 %v946
        %v1032 = vunpack.c.h.b16 %v946
        %v1033 = vunpack.c.l.b16 %v947
        %v1034 = vunpack.c.h.b16 %v947
        %v1035 = vunpack.c.l.b16 %v948
        %v1036 = vunpack.c.h.b16 %v948
        %v1037 = vunpack.c.l.b16 %v949
        %v1038 = vunpack.c.h.b16 %v949
        %v1039 = vunpack.c.l.b16 %v950
        %v1040 = vunpack.c.h.b16 %v950
        %v1041 = vunpack.c.l.b16 %v951
        %v1042 = vunpack.c.h.b16 %v951
        %v1043 = vunpack.c.l.b16 %v952
        %v1044 = vunpack.c.h.b16 %v952
        %v1045 = vunpack.c.l.b16 %v953
        %v1046 = vunpack.c.h.b16 %v953
        %v1047 = vunpack.c.l.b16 %v954
        %v1048 = vunpack.c.h.b16 %v954
        %v1049 = vunpack.c.l.b16 %v955
        %v1050 = vunpack.c.h.b16 %v955
        %v1051 = vunpack.c.l.b16 %v956
        %v1052 = vunpack.c.h.b16 %v956
        %v1053 = vunpack.c.l.b16 %v957
        %v1054 = vunpack.c.h.b16 %v957
        %v1055 = vunpack.c.l.b16 %v958
        %v1056 = vunpack.c.h.b16 %v958
        %v1057 = vunpack.c.l.b16 %v959
        %v1058 = vunpack.c.h.b16 %v959
        %v1059 = vunpack.c.l.b16 %v960
        %v1060 = vunpack.c.h.b16 %v960
        %v1061 = vunpack.c.l.b16 %v961
        %v1062 = vunpack.c.h.b16 %v961
        %v1063 = vunpack.c.l.b16 %v962
        %v1064 = vunpack.c.h.b16 %v962
        %v1065 = vunpack.c.l.b16 %v963
        %v1066 = vunpack.c.h.b16 %v963
        %v1067 = vunpack.c.l.b16 %v964
        %v1068 = vunpack.c.h.b16 %v964
        %v1069 = vunpack.c.l.b16 %v965
        %v1070 = vunpack.c.h.b16 %v965
        %v1071 = vunpack.c.l.b16 %v966
        %v1072 = vunpack.c.h.b16 %v966
        %v1073 = vunpack.c.l.b16 %v967
        %v1074 = vunpack.c.h.b16 %v967
        %v1075 = vunpack.c.l.b16 %v968
        %v1076 = vunpack.c.h.b16 %v968
        %v1077 = vunpack.c.l.b16 %v969
        %v1078 = vunpack.c.h.b16 %v969
        %v1079 = vpack.c.b16 %v1017, %v1015
        %v1080 = vpack.c.b16 %v1018, %v1016
        %v1081 = vpack.c.b16 %v1021, %v1019
        %v1082 = vpack.c.b16 %v1022, %v1020
        %v1083 = vpack.c.b16 %v1025, %v1023
        %v1084 = vpack.c.b16 %v1026, %v1024
        %v1085 = vpack.c.b16 %v1029, %v1027
        %v1086 = vpack.c.b16 %v1030, %v1028
        %v1087 = vpack.c.b16 %v1033, %v1031
        %v1088 = vpack.c.b16 %v1034, %v1032
        %v1089 = vpack.c.b16 %v1037, %v1035
        %v1090 = vpack.c.b16 %v1038, %v1036
        %v1091 = vpack.c.b16 %v1041, %v1039
        %v1092 = vpack.c.b16 %v1042, %v1040
        %v1093 = vpack.c.b16 %v1045, %v1043
        %v1094 = vpack.c.b16 %v1046, %v1044
        %v1095 = vpack.c.b16 %v1049, %v1047
        %v1096 = vpack.c.b16 %v1050, %v1048
        %v1097 = vpack.c.b16 %v1053, %v1051
        %v1098 = vpack.c.b16 %v1054, %v1052
        %v1099 = vpack.c.b16 %v1057, %v1055
        %v1100 = vpack.c.b16 %v1058, %v1056
        %v1101 = vpack.c.b16 %v1061, %v1059
        %v1102 = vpack.c.b16 %v1062, %v1060
        %v1103 = vpack.c.b16 %v1065, %v1063
        %v1104 = vpack.c.b16 %v1066, %v1064
        %v1105 = vpack.c.b16 %v1069, %v1067
        %v1106 = vpack.c.b16 %v1070, %v1068
        %v1107 = vpack.c.b16 %v1073, %v1071
        %v1108 = vpack.c.b16 %v1074, %v1072
        %v1109 = vpack.c.b16 %v1077, %v1075
        %v1110 = vpack.c.b16 %v1078, %v1076
        %1143 = vmatprep.subr.bf16.mxu0 %v1094
        %1144 = vmatpush1.bf16.msra.mxu0 %v1093
        %1145 = vmatprep.subr.bf16.mxu0 %v1092
        %1146 = vmatpush1.bf16.msra.mxu0 %v1091
        %1147 = vmatprep.subr.bf16.mxu0 %v1090
        %1148 = vmatpush1.bf16.msra.mxu0 %v1089
        %1149 = vmatprep.subr.bf16.mxu0 %v1088
        %1150 = vmatpush1.bf16.msra.mxu0 %v1087
        %1151 = vmatprep.subr.bf16.mxu0 %v1086
        %1152 = vmatpush1.bf16.msra.mxu0 %v1085
        %1153 = vmatprep.subr.bf16.mxu0 %v1084
        %1154 = vmatpush1.bf16.msra.mxu0 %v1083
        %1155 = vmatprep.subr.bf16.mxu0 %v1082
        %1156 = vmatpush1.bf16.msra.mxu0 %v1081
        %1157 = vmatprep.subr.bf16.mxu0 %v1080
        %1158 = vmatpush1.bf16.msra.mxu0 %v1079
        %1159 = vmatprep.subr.bf16.mxu0 %v1110
        %1160 = vmatpush2.bf16.msra.mxu0 %v1109
        %1161 = vmatprep.subr.bf16.mxu0 %v1108
        %1162 = vmatpush2.bf16.msra.mxu0 %v1107
        %1163 = vmatprep.subr.bf16.mxu0 %v1106
        %1164 = vmatpush2.bf16.msra.mxu0 %v1105
        %1165 = vmatprep.subr.bf16.mxu0 %v1104
        %1166 = vmatpush2.bf16.msra.mxu0 %v1103
        %1167 = vmatprep.subr.bf16.mxu0 %v1102
        %1168 = vmatpush2.bf16.msra.mxu0 %v1101
        %1169 = vmatprep.subr.bf16.mxu0 %v1100
        %1170 = vmatpush2.bf16.msra.mxu0 %v1099
        %1171 = vmatprep.subr.bf16.mxu0 %v1098
        %1172 = vmatpush2.bf16.msra.mxu0 %v1097
        %1173 = vmatprep.subr.bf16.mxu0 %v1096
        %1174 = vmatpush2.bf16.msra.mxu0 %v1095
        %1175 = vmatprep.mubr.bf16.mxu0 %v919
        %1176 = vmatmul.mubr.bf16.gmra.mxu0 %v918
        %v1177 = vpop.f32.mrf.mxu0
        %v1178 = vadd.f32 %v976, %v1177
        %v1179 = vpop.f32.mrf.mxu0
        %v1180 = vadd.f32 %v980, %v1179
        %v1181 = vpop.f32.mrf.mxu0
        %v1182 = vadd.f32 %v976, %v1181
        %v1183 = vpop.f32.mrf.mxu0
        %v1184 = vadd.f32 %v980, %v1183
        %1185 = vmatprep.mubr.bf16.mxu0 %v921
        %1186 = vmatmul.mubr.bf16.gmra.mxu0 %v920
        %v1187 = vpop.f32.mrf.mxu0
        %v1188 = vadd.f32 %v976, %v1187
        %v1189 = vpop.f32.mrf.mxu0
        %v1190 = vadd.f32 %v980, %v1189
        %v1191 = vpop.f32.mrf.mxu0
        %v1192 = vadd.f32 %v976, %v1191
        %v1193 = vpop.f32.mrf.mxu0
        %v1194 = vadd.f32 %v980, %v1193
        %1195 = vmatprep.mubr.bf16.mxu0 %v923
        %1196 = vmatmul.mubr.bf16.gmra.mxu0 %v922
        %v1197 = vpop.f32.mrf.mxu0
        %v1198 = vadd.f32 %v976, %v1197
        %v1199 = vpop.f32.mrf.mxu0
        %v1200 = vadd.f32 %v980, %v1199
        %v1201 = vpop.f32.mrf.mxu0
        %v1202 = vadd.f32 %v976, %v1201
        %v1203 = vpop.f32.mrf.mxu0
        %v1204 = vadd.f32 %v980, %v1203
        %1205 = vmatprep.mubr.bf16.mxu0 %v925
        %1206 = vmatmul.mubr.bf16.gmra.mxu0 %v924
        %v1207 = vpop.f32.mrf.mxu0
        %v1208 = vadd.f32 %v976, %v1207
        %v1209 = vpop.f32.mrf.mxu0
        %v1210 = vadd.f32 %v980, %v1209
        %v1211 = vpop.f32.mrf.mxu0
        %v1212 = vadd.f32 %v976, %v1211
        %v1213 = vpop.f32.mrf.mxu0
        %v1214 = vadd.f32 %v980, %v1213
        %1215 = vmatprep.mubr.bf16.mxu0 %v927
        %1216 = vmatmul.mubr.bf16.gmra.mxu0 %v926
        %v1217 = vpop.f32.mrf.mxu0
        %v1218 = vadd.f32 %v976, %v1217
        %v1219 = vpop.f32.mrf.mxu0
        %v1220 = vadd.f32 %v980, %v1219
        %v1221 = vpop.f32.mrf.mxu0
        %v1222 = vadd.f32 %v976, %v1221
        %v1223 = vpop.f32.mrf.mxu0
        %v1224 = vadd.f32 %v980, %v1223
        %1225 = vmatprep.mubr.bf16.mxu0 %v929
        %1226 = vmatmul.mubr.bf16.gmra.mxu0 %v928
        %v1227 = vpop.f32.mrf.mxu0
        %v1228 = vadd.f32 %v976, %v1227
        %v1229 = vpop.f32.mrf.mxu0
        %v1230 = vadd.f32 %v980, %v1229
        %v1231 = vpop.f32.mrf.mxu0
        %v1232 = vadd.f32 %v976, %v1231
        %v1233 = vpop.f32.mrf.mxu0
        %v1234 = vadd.f32 %v980, %v1233
        %1235 = vmatprep.mubr.bf16.mxu0 %v931
        %1236 = vmatmul.mubr.bf16.gmra.mxu0 %v930
        %v1237 = vpop.f32.mrf.mxu0
        %v1238 = vadd.f32 %v976, %v1237
        %v1239 = vpop.f32.mrf.mxu0
        %v1240 = vadd.f32 %v980, %v1239
        %v1241 = vpop.f32.mrf.mxu0
        %v1242 = vadd.f32 %v976, %v1241
        %v1243 = vpop.f32.mrf.mxu0
        %v1244 = vadd.f32 %v980, %v1243
        %1245 = vmatprep.mubr.bf16.mxu0 %v933
        %1246 = vmatmul.mubr.bf16.gmra.mxu0 %v932
        %v1247 = vpop.f32.mrf.mxu0
        %v1248 = vadd.f32 %v976, %v1247
        %v1249 = vpop.f32.mrf.mxu0
        %v1250 = vadd.f32 %v980, %v1249
        %v1251 = vpop.f32.mrf.mxu0
        %v1252 = vadd.f32 %v976, %v1251
        %v1253 = vpop.f32.mrf.mxu0
        %v1254 = vadd.f32 %v980, %v1253
        %1255 = vmatprep.mubr.bf16.mxu0 %v935
        %1256 = vmatmul.mubr.bf16.gmra.mxu0 %v934
        %v1257 = vpop.f32.mrf.mxu0
        %v1258 = vadd.f32 %v976, %v1257
        %v1259 = vpop.f32.mrf.mxu0
        %v1260 = vadd.f32 %v980, %v1259
        %v1261 = vpop.f32.mrf.mxu0
        %v1262 = vadd.f32 %v976, %v1261
        %v1263 = vpop.f32.mrf.mxu0
        %v1264 = vadd.f32 %v980, %v1263
        %1265 = vmatprep.mubr.bf16.mxu0 %v937
        %1266 = vmatmul.mubr.bf16.gmra.mxu0 %v936
        %v1267 = vpop.f32.mrf.mxu0
        %v1268 = vadd.f32 %v976, %v1267
        %v1269 = vpop.f32.mrf.mxu0
        %v1270 = vadd.f32 %v980, %v1269
        %v1271 = vpop.f32.mrf.mxu0
        %v1272 = vpop.f32.mrf.mxu0
        %1273 = vdwg.mxu0
        %v1274 = vmax.f32 %v1178, 0.0
        %v1275 = vmax.f32 %v1180, 0.0
        %v1276 = vmax.f32 %v1182, 0.0
        %v1277 = vmax.f32 %v1184, 0.0
        %v1278 = vmax.f32 %v1188, 0.0
        %v1279 = vmax.f32 %v1190, 0.0
        %v1280 = vmax.f32 %v1192, 0.0
        %v1281 = vmax.f32 %v1194, 0.0
        %v1282 = vmax.f32 %v1198, 0.0
        %v1283 = vmax.f32 %v1200, 0.0
        %v1284 = vmax.f32 %v1202, 0.0
        %v1285 = vmax.f32 %v1204, 0.0
        %v1286 = vmax.f32 %v1208, 0.0
        %v1287 = vmax.f32 %v1210, 0.0
        %v1288 = vmax.f32 %v1212, 0.0
        %v1289 = vmax.f32 %v1214, 0.0
        %v1290 = vmax.f32 %v1218, 0.0
        %v1291 = vmax.f32 %v1220, 0.0
        %v1292 = vmax.f32 %v1222, 0.0
        %v1293 = vmax.f32 %v1224, 0.0
        %v1294 = vmax.f32 %v1228, 0.0
        %v1295 = vmax.f32 %v1230, 0.0
        %v1296 = vmax.f32 %v1232, 0.0
        %v1297 = vmax.f32 %v1234, 0.0
        %v1298 = vmax.f32 %v1238, 0.0
        %v1299 = vmax.f32 %v1240, 0.0
        %v1300 = vmax.f32 %v1242, 0.0
        %v1301 = vmax.f32 %v1244, 0.0
        %v1302 = vmax.f32 %v1248, 0.0
        %v1303 = vmax.f32 %v1250, 0.0
        %v1304 = vmax.f32 %v1252, 0.0
        %v1305 = vmax.f32 %v1254, 0.0
        %v1306 = vmax.f32 %v1258, 0.0
        %v1307 = vmax.f32 %v1260, 0.0
        %v1308 = vmax.f32 %v1262, 0.0
        %v1309 = vmax.f32 %v1264, 0.0
        %v1310 = vmax.f32 %v1268, 0.0
        %v1311 = vmax.f32 %v1270, 0.0
        %v1312 = vpack.c.bf16 %v1276, %v1274
        %v1313 = vpack.c.bf16 %v1277, %v1275
        %v1314 = vpack.c.bf16 %v1280, %v1278
        %v1315 = vpack.c.bf16 %v1281, %v1279
        %v1316 = vpack.c.bf16 %v1284, %v1282
        %v1317 = vpack.c.bf16 %v1285, %v1283
        %v1318 = vpack.c.bf16 %v1288, %v1286
        %v1319 = vpack.c.bf16 %v1289, %v1287
        %v1320 = vpack.c.bf16 %v1292, %v1290
        %v1321 = vpack.c.bf16 %v1293, %v1291
        %v1322 = vpack.c.bf16 %v1296, %v1294
        %v1323 = vpack.c.bf16 %v1297, %v1295
        %v1324 = vpack.c.bf16 %v1300, %v1298
        %v1325 = vpack.c.bf16 %v1301, %v1299
        %v1326 = vpack.c.bf16 %v1304, %v1302
        %v1327 = vpack.c.bf16 %v1305, %v1303
        %v1328 = vpack.c.bf16 %v1308, %v1306
        %v1329 = vpack.c.bf16 %v1309, %v1307
        %v1330 = vpack.c.bf16 %v1310, %v1310
        %v1331 = vpack.c.bf16 %v1311, %v1311
        %v1332 = vld [vmem:[%s4] sm:$0xf]
        %v1333 = vld [vmem:[%s4 + $0x4] sm:$0xf]
        %v1334 = vld [vmem:[%s4 + $0x8] sm:$0xf]
        %v1335 = vld [vmem:[%s4 + $0xc] sm:$0xf]
        %v1336 = vld [vmem:[%s4 + $0x10] sm:$0xf]
        %v1337 = vld [vmem:[%s4 + $0x14] sm:$0xf]
        %v1338 = vld [vmem:[%s4 + $0x18] sm:$0xf]
        %v1339 = vld [vmem:[%s4 + $0x1c] sm:$0xf]
        %v1340 = vld [vmem:[%s4 + $0x20] sm:$0xf]
        %v1341 = vld [vmem:[%s4 + $0x24] sm:$0xf]
        %v1342 = vld [vmem:[%s4 + $0x28] sm:$0xf]
        %v1343 = vld [vmem:[%s4 + $0x2c] sm:$0xf]
        %v1344 = vld [vmem:[%s4 + $0x30] sm:$0xf]
        %v1345 = vld [vmem:[%s4 + $0x34] sm:$0xf]
        %v1346 = vld [vmem:[%s4 + $0x38] sm:$0xf]
        %v1347 = vld [vmem:[%s4 + $0x3c] sm:$0xf]
        %v1348 = vld [vmem:[%s4 + $0x40] sm:$0xf]
        %v1349 = vld [vmem:[%s4 + $0x44] sm:$0xf]
        %v1350 = vld [vmem:[%s4 + $0x48] sm:$0xf]
        %v1351 = vld [vmem:[%s4 + $0x4c] sm:$0xf]
        %v1352 = vld [vmem:[%s4 + $0x50] sm:$0xf]
        %v1353 = vld [vmem:[%s4 + $0x54] sm:$0xf]
        %v1354 = vld [vmem:[%s4 + $0x58] sm:$0xf]
        %v1355 = vld [vmem:[%s4 + $0x5c] sm:$0xf]
        %v1356 = vld [vmem:[%s4 + $0x60] sm:$0xf]
        %v1357 = vld [vmem:[%s4 + $0x64] sm:$0xf]
        %v1358 = vld [vmem:[%s4 + $0x68] sm:$0xf]
        %v1359 = vld [vmem:[%s4 + $0x6c] sm:$0xf]
        %v1360 = vld [vmem:[%s4 + $0x70] sm:$0xf]
        %v1361 = vld [vmem:[%s4 + $0x74] sm:$0xf]
        %v1362 = vld [vmem:[%s4 + $0x78] sm:$0xf]
        %v1363 = vld [vmem:[%s4 + $0x7c] sm:$0xf]
        %v1364 = vld [vmem:[%s5 + $0x3] sm:$0x1]
        %v1365 = vlaneseq
        %v1366 = vshrl.u32 %v1365, 7
        %v1367 = vsub.s32 0, %v1366
        %v1368 = vrot.slane %v1364, %v1367
        %v1401 = vunpack.c.l.b16 %v1332
        %v1402 = vunpack.c.l.b16 %v1333
        %v1403 = vunpack.c.l.b16 %v1334
        %v1404 = vunpack.c.l.b16 %v1335
        %v1405 = vunpack.c.l.b16 %v1336
        %v1406 = vunpack.c.l.b16 %v1337
        %v1407 = vunpack.c.l.b16 %v1338
        %v1408 = vunpack.c.l.b16 %v1339
        %v1409 = vunpack.c.l.b16 %v1340
        %v1410 = vunpack.c.l.b16 %v1341
        %v1411 = vunpack.c.l.b16 %v1342
        %v1412 = vunpack.c.l.b16 %v1343
        %v1413 = vunpack.c.l.b16 %v1344
        %v1414 = vunpack.c.l.b16 %v1345
        %v1415 = vunpack.c.l.b16 %v1346
        %v1416 = vunpack.c.l.b16 %v1347
        %v1417 = vunpack.c.l.b16 %v1348
        %v1418 = vunpack.c.l.b16 %v1349
        %v1419 = vunpack.c.l.b16 %v1350
        %v1420 = vunpack.c.l.b16 %v1351
        %v1421 = vunpack.c.l.b16 %v1352
        %v1422 = vunpack.c.l.b16 %v1353
        %v1423 = vunpack.c.l.b16 %v1354
        %v1424 = vunpack.c.l.b16 %v1355
        %v1425 = vunpack.c.l.b16 %v1356
        %v1426 = vunpack.c.l.b16 %v1357
        %v1427 = vunpack.c.l.b16 %v1358
        %v1428 = vunpack.c.l.b16 %v1359
        %v1429 = vunpack.c.l.b16 %v1360
        %v1430 = vunpack.c.l.b16 %v1361
        %v1431 = vunpack.c.l.b16 %v1362
        %v1432 = vunpack.c.l.b16 %v1363
        %v1433 = vpack.c.b16 %v1402, %v1401
        %v1434 = vpack.c.b16 %v1404, %v1403
        %v1435 = vpack.c.b16 %v1406, %v1405
        %v1436 = vpack.c.b16 %v1408, %v1407
        %v1437 = vpack.c.b16 %v1410, %v1409
        %v1438 = vpack.c.b16 %v1412, %v1411
        %v1439 = vpack.c.b16 %v1414, %v1413
        %v1440 = vpack.c.b16 %v1416, %v1415
        %v1441 = vpack.c.b16 %v1418, %v1417
        %v1442 = vpack.c.b16 %v1420, %v1419
        %v1443 = vpack.c.b16 %v1422, %v1421
        %v1444 = vpack.c.b16 %v1424, %v1423
        %v1445 = vpack.c.b16 %v1426, %v1425
        %v1446 = vpack.c.b16 %v1428, %v1427
        %v1447 = vpack.c.b16 %v1430, %v1429
        %v1448 = vpack.c.b16 %v1432, %v1431
        %1465 = vmatprep.subr.bf16.mxu0 0
        %1466 = vmatpush1.bf16.msra.mxu0 %v1440
        %1467 = vmatprep.subr.bf16.mxu0 0
        %1468 = vmatpush1.bf16.msra.mxu0 %v1439
        %1469 = vmatprep.subr.bf16.mxu0 0
        %1470 = vmatpush1.bf16.msra.mxu0 %v1438
        %1471 = vmatprep.subr.bf16.mxu0 0
        %1472 = vmatpush1.bf16.msra.mxu0 %v1437
        %1473 = vmatprep.subr.bf16.mxu0 0
        %1474 = vmatpush1.bf16.msra.mxu0 %v1436
        %1475 = vmatprep.subr.bf16.mxu0 0
        %1476 = vmatpush1.bf16.msra.mxu0 %v1435
        %1477 = vmatprep.subr.bf16.mxu0 0
        %1478 = vmatpush1.bf16.msra.mxu0 %v1434
        %1479 = vmatprep.subr.bf16.mxu0 0
        %1480 = vmatpush1.bf16.msra.mxu0 %v1433
        %1481 = vmatprep.subr.bf16.mxu0 0
        %1482 = vmatpush2.bf16.msra.mxu0 %v1448
        %1483 = vmatprep.subr.bf16.mxu0 0
        %1484 = vmatpush2.bf16.msra.mxu0 %v1447
        %1485 = vmatprep.subr.bf16.mxu0 0
        %1486 = vmatpush2.bf16.msra.mxu0 %v1446
        %1487 = vmatprep.subr.bf16.mxu0 0
        %1488 = vmatpush2.bf16.msra.mxu0 %v1445
        %1489 = vmatprep.subr.bf16.mxu0 0
        %1490 = vmatpush2.bf16.msra.mxu0 %v1444
        %1491 = vmatprep.subr.bf16.mxu0 0
        %1492 = vmatpush2.bf16.msra.mxu0 %v1443
        %1493 = vmatprep.subr.bf16.mxu0 0
        %1494 = vmatpush2.bf16.msra.mxu0 %v1442
        %1495 = vmatprep.subr.bf16.mxu0 0
        %1496 = vmatpush2.bf16.msra.mxu0 %v1441
        %1497 = vmatprep.mubr.bf16.mxu0 %v1313
        %1498 = vmatmul.mubr.bf16.gmra.mxu0 %v1312
        %v1499 = vpop.f32.mrf.mxu0
        %v1500 = vadd.f32 %v1368, %v1499
        %v1501 = vpop.f32.mrf.mxu0
        %v1502 = vpop.f32.mrf.mxu0
        %v1503 = vadd.f32 %v1368, %v1502
        %v1504 = vpop.f32.mrf.mxu0
        %1505 = vmatprep.mubr.bf16.mxu0 %v1315
        %1506 = vmatmul.mubr.bf16.gmra.mxu0 %v1314
        %v1507 = vpop.f32.mrf.mxu0
        %v1508 = vadd.f32 %v1368, %v1507
        %v1509 = vpop.f32.mrf.mxu0
        %v1510 = vpop.f32.mrf.mxu0
        %v1511 = vadd.f32 %v1368, %v1510
        %v1512 = vpop.f32.mrf.mxu0
        %1513 = vmatprep.mubr.bf16.mxu0 %v1317
        %1514 = vmatmul.mubr.bf16.gmra.mxu0 %v1316
        %v1515 = vpop.f32.mrf.mxu0
        %v1516 = vadd.f32 %v1368, %v1515
        %v1517 = vpop.f32.mrf.mxu0
        %v1518 = vpop.f32.mrf.mxu0
        %v1519 = vadd.f32 %v1368, %v1518
        %v1520 = vpop.f32.mrf.mxu0
        %1521 = vmatprep.mubr.bf16.mxu0 %v1319
        %1522 = vmatmul.mubr.bf16.gmra.mxu0 %v1318
        %v1523 = vpop.f32.mrf.mxu0
        %v1524 = vadd.f32 %v1368, %v1523
        %v1525 = vpop.f32.mrf.mxu0
        %v1526 = vpop.f32.mrf.mxu0
        %v1527 = vadd.f32 %v1368, %v1526
        %v1528 = vpop.f32.mrf.mxu0
        %1529 = vmatprep.mubr.bf16.mxu0 %v1321
        %1530 = vmatmul.mubr.bf16.gmra.mxu0 %v1320
        %v1531 = vpop.f32.mrf.mxu0
        %v1532 = vadd.f32 %v1368, %v1531
        %v1533 = vpop.f32.mrf.mxu0
        %v1534 = vpop.f32.mrf.mxu0
        %v1535 = vadd.f32 %v1368, %v1534
        %v1536 = vpop.f32.mrf.mxu0
        %1537 = vmatprep.mubr.bf16.mxu0 %v1323
        %1538 = vmatmul.mubr.bf16.gmra.mxu0 %v1322
        %v1539 = vpop.f32.mrf.mxu0
        %v1540 = vadd.f32 %v1368, %v1539
        %v1541 = vpop.f32.mrf.mxu0
        %v1542 = vpop.f32.mrf.mxu0
        %v1543 = vadd.f32 %v1368, %v1542
        %v1544 = vpop.f32.mrf.mxu0
        %1545 = vmatprep.mubr.bf16.mxu0 %v1325
        %1546 = vmatmul.mubr.bf16.gmra.mxu0 %v1324
        %v1547 = vpop.f32.mrf.mxu0
        %v1548 = vadd.f32 %v1368, %v1547
        %v1549 = vpop.f32.mrf.mxu0
        %v1550 = vpop.f32.mrf.mxu0
        %v1551 = vadd.f32 %v1368, %v1550
        %v1552 = vpop.f32.mrf.mxu0
        %1553 = vmatprep.mubr.bf16.mxu0 %v1327
        %1554 = vmatmul.mubr.bf16.gmra.mxu0 %v1326
        %v1555 = vpop.f32.mrf.mxu0
        %v1556 = vadd.f32 %v1368, %v1555
        %v1557 = vpop.f32.mrf.mxu0
        %v1558 = vpop.f32.mrf.mxu0
        %v1559 = vadd.f32 %v1368, %v1558
        %v1560 = vpop.f32.mrf.mxu0
        %1561 = vmatprep.mubr.bf16.mxu0 %v1329
        %1562 = vmatmul.mubr.bf16.gmra.mxu0 %v1328
        %v1563 = vpop.f32.mrf.mxu0
        %v1564 = vadd.f32 %v1368, %v1563
        %v1565 = vpop.f32.mrf.mxu0
        %v1566 = vpop.f32.mrf.mxu0
        %v1567 = vadd.f32 %v1368, %v1566
        %v1568 = vpop.f32.mrf.mxu0
        %1569 = vmatprep.mubr.bf16.mxu0 %v1331
        %1570 = vmatmul.mubr.bf16.gmra.mxu0 %v1330
        %v1571 = vpop.f32.mrf.mxu0
        %v1572 = vadd.f32 %v1368, %v1571
        %v1573 = vpop.f32.mrf.mxu0
        %v1574 = vpop.f32.mrf.mxu0
        %v1575 = vpop.f32.mrf.mxu0
        %1576 = vdwg.mxu0
        %v1577 = vtanh.pop %v1500
        %v1578 = vtanh.pop %v1503
        %v1579 = vtanh.pop %v1508
        %v1580 = vtanh.pop %v1511
        %v1581 = vtanh.pop %v1516
        %v1582 = vtanh.pop %v1519
        %v1583 = vtanh.pop %v1524
        %v1584 = vtanh.pop %v1527
        %v1585 = vtanh.pop %v1532
        %v1586 = vtanh.pop %v1535
        %v1587 = vtanh.pop %v1540
        %v1588 = vtanh.pop %v1543
        %v1589 = vtanh.pop %v1548
        %v1590 = vtanh.pop %v1551
        %v1591 = vtanh.pop %v1556
        %v1592 = vtanh.pop %v1559
        %v1593 = vtanh.pop %v1564
        %v1594 = vtanh.pop %v1567
        %v1595 = vtanh.pop %v1572
        %vm1596 = vcmask 64512
        %1597 = vst.msk [vmem:[%s268] sm:$0xff] %vm1596, %v1577
        %1598 = vst.msk [vmem:[%s268 + $0x8] sm:$0xff] %vm1596, %v1578
        %1599 = vst.msk [vmem:[%s268 + $0x10] sm:$0xff] %vm1596, %v1579
        %1600 = vst.msk [vmem:[%s268 + $0x18] sm:$0xff] %vm1596, %v1580
        %1601 = vst.msk [vmem:[%s268 + $0x20] sm:$0xff] %vm1596, %v1581
        %1602 = vst.msk [vmem:[%s268 + $0x28] sm:$0xff] %vm1596, %v1582
        %1603 = vst.msk [vmem:[%s268 + $0x30] sm:$0xff] %vm1596, %v1583
        %1604 = vst.msk [vmem:[%s268 + $0x38] sm:$0xff] %vm1596, %v1584
        %1605 = vst.msk [vmem:[%s268 + $0x40] sm:$0xff] %vm1596, %v1585
        %1606 = vst.msk [vmem:[%s268 + $0x48] sm:$0xff] %vm1596, %v1586
        %1607 = vst.msk [vmem:[%s268 + $0x50] sm:$0xff] %vm1596, %v1587
        %1608 = vst.msk [vmem:[%s268 + $0x58] sm:$0xff] %vm1596, %v1588
        %1609 = vst.msk [vmem:[%s268 + $0x60] sm:$0xff] %vm1596, %v1589
        %1610 = vst.msk [vmem:[%s268 + $0x68] sm:$0xff] %vm1596, %v1590
        %1611 = vst.msk [vmem:[%s268 + $0x70] sm:$0xff] %vm1596, %v1591
        %1612 = vst.msk [vmem:[%s268 + $0x78] sm:$0xff] %vm1596, %v1592
        %1613 = vst.msk [vmem:[%s268 + $0x80] sm:$0xff] %vm1596, %v1593
        %1614 = vst.msk [vmem:[%s268 + $0x88] sm:$0xff] %vm1596, %v1594
        %1615 = vst.msk [vmem:[%s268 + $0x90] sm:$0xff] %vm1596, %v1595
        %s1616 = smul.u32 19, %s18
        %p1617 = scmp.lt.s32.totalorder %s1616, 37
        %s1618 = scalar_select %p1617, %s1616, 37
        %s1619 = smul.addr %s1618, 8
        %s1620 = scalar_lea.vmem %s6, %s1619
        // Predicated region
        $region49: #{tpu_custom_call.1} parent=43 // pred_check
          %p1621 = pneg %p167
        $region50: #{tpu_custom_call.1} parent=43 // pred_check_branch
          %1623 = sbr.rel (%p1621) target = $region52
        $region51: #{tpu_custom_call.1} parent=43 // pred_region
          %s1624 = smul.u32 19, %s18
        $region52: #{tpu_custom_call.1} parent=43 // pred_fallthru
          _
      $region44: #{tpu_custom_call.1} parent=5 // pred_fallthru
        _
      %p1625 = scmp.le.s32.totalorder 2, %s13
      // Predicated region
      $region53: #{tpu_custom_call.1} parent=5 // pred_check
        %p1626 = pneg %p1625
      $region54: #{tpu_custom_call.1} parent=5 // pred_check_branch
        %1628 = sbr.rel (%p1626) target = $region56
      $region55: #{tpu_custom_call.1} parent=5 // pred_region
        %s1629 = ssub.s32 %s13, 2
        // Predicated region
        $region57: #{tpu_custom_call.1} parent=55 // pred_check
          %p1630 = pneg %p173
        $region58: #{tpu_custom_call.1} parent=55 // pred_check_branch
          %1632 = sbr.rel (%p1630) target = $region60
        $region59: #{tpu_custom_call.1} parent=55 // pred_region
          %s1633 = smul.u32 19, %s19
          %p1634 = scmp.lt.s32.totalorder %s1633, 37
          %s1635 = scalar_select %p1634, %s1633, 37
          %s1636 = smul.addr %s1635, 8
          %s1637 = scalar_lea.vmem %s6, %s1636
        $region60: #{tpu_custom_call.1} parent=55 // pred_fallthru
          _
      $region56: #{tpu_custom_call.1} parent=5 // pred_fallthru
        _
    $region6: #{tpu_custom_call.1} parent=1 // loop_footer
      %s17 = sadd.s32 1, %s13
    $region7: #{tpu_custom_call.1} parent=1 // loop_footer_branch
      %12 = sbr.rel target = $region3
    $region8: #{tpu_custom_call.1} parent=1 // loop_exit
      _
    %1638 = vsyncpa [#allocation3], 1
    %s1639 = scalar_lea.sflag [#allocation3], 1
    %1640 = vsyncpa %s1639, 1

</llo_original>
